<compile_context>
chip_gen: v6e
topology: v6e:2x2x1
jax: 0.10.0
libtpu: 0.0.40
codegen_flags: <defaults>
</compile_context>

<pallas_src>
import numpy as np
import jax
import jax.numpy as jnp
from jax import lax
from jax.experimental import pallas as pl
from jax.experimental.pallas import tpu as pltpu


# ----------------------------------------------------------------------------
# Host-side helpers (thin 0/1 group-reduce / replication matrices)
# ----------------------------------------------------------------------------

def _group_mat(rows, cols, rdiv, cdiv, val=1.0):
    """M[i, j] = val if (i // rdiv) == (j // cdiv) else 0."""
    r = np.arange(rows)[:, None] // rdiv
    c = np.arange(cols)[None, :] // cdiv
    return (r == c).astype(np.float32) * val


# ----------------------------------------------------------------------------
# Fused Pallas kernel
# ----------------------------------------------------------------------------

def _make_fused_kernel(B, V, N, T, eps, max_iter, thresh):
    BV, NT = B * V, N * T
    u_fill = 1.0 / V                       # torch xx fill (1 / #vision prompts)
    v_fill = 1.0 / T                       # torch yy fill (1 / #text prompts)
    inv_eps = 1.0 / eps
    inv_cnt = 1.0 / float(B * N * V)       # torch err = mean over r of shape (B*N, V)
    pairs_per_check = 2                    # amortized early-exit reduce
    n_outer = max(1, max_iter // pairs_per_check)

    def kernel(x_eot_ref, ln_gb_ref, tproj_ref,
               ctx_ref, pw_ref,
               pix_ref, wpix_ref, wctx_ref, bias_ref, ctx_avg_rep_ref,
               rep_b_ref, s_t_ref, rep_t_ref, s_v_ref, s_t_out_ref,
               out_ref):
        f32 = jnp.float32
        bf16 = jnp.bfloat16

        # ---- text features at EOT: LayerNorm (f32 VPU) -> @ text_proj (bf16 MXU) -> L2
        x = x_eot_ref[...]                                           # (NT, ctx_dim) f32
        gb = ln_gb_ref[...]                                          # (2, ctx_dim)
        mu = jnp.mean(x, axis=-1, keepdims=True)
        xc = x - mu
        var = jnp.mean(xc * xc, axis=-1, keepdims=True)
        y = xc * lax.rsqrt(var + 1e-5) * gb[0:1, :] + gb[1:2, :]
        tf = jnp.dot(y.astype(bf16), tproj_ref[...], preferred_element_type=f32)  # (NT, D)
        # NOTE: no eps in the norm, faithful to torch's x / x.norm().
        tf = tf * lax.rsqrt(jnp.sum(tf * tf, axis=-1, keepdims=True))

        # ---- image features (ViT stub): prompt proj -> mean ctx -> linear -> L2
        ctx_p = jnp.dot(ctx_ref[...], pw_ref[...], preferred_element_type=f32)      # (T*n_ctx, vis)
        ctx_rep = jnp.dot(ctx_avg_rep_ref[...], ctx_p.astype(bf16),
                          preferred_element_type=f32)                               # (BV, vis)
        ctx_feat = jnp.dot(ctx_rep.astype(bf16), wctx_ref[...],
                           preferred_element_type=f32)                              # (BV, D)
        pix_feat = jnp.dot(pix_ref[...], wpix_ref[...], preferred_element_type=f32)  # (B, D)
        imf = (jnp.dot(rep_b_ref[...], pix_feat, preferred_element_type=f32)
               + ctx_feat + bias_ref[...])                                           # (BV, D)
        imf = imf * lax.rsqrt(jnp.sum(imf * imf, axis=-1, keepdims=True))

        # ---- pairwise similarity: ONE matmul; sim[b*V+v, n*T+t]
        sim = lax.dot_general(imf.astype(bf16), tf.astype(bf16),
                              (((1,), (1,)), ((), ())), preferred_element_type=f32)  # (BV, NT)
        K2 = jnp.exp((sim - 1.0) * inv_eps)                                           # exp(-(1-sim)/eps)

        rep_b = rep_b_ref[...]    # (BV, B)  broadcast over v within each b
        s_t = s_t_ref[...]        # (NT, N)  sum over t within each n
        rep_t = rep_t_ref[...]    # (N, NT)  broadcast over t within each n
        s_v = s_v_ref[...]        # (B, BV)  sum over v within each b

        # ---- Sinkhorn; reduced state r: (BV, N), c: (B, NT)
        def half_pair(r, c):
            c_exp = jnp.dot(rep_b, c, preferred_element_type=f32)         # (BV, NT)
            kc = jnp.dot(K2 * c_exp, s_t, preferred_element_type=f32)     # (BV, N)
            r_new = u_fill * pl.reciprocal(kc, approx=True)
            r_exp = jnp.dot(r_new, rep_t, preferred_element_type=f32)     # (BV, NT)
            kr = jnp.dot(s_v, K2 * r_exp, preferred_element_type=f32)     # (B, NT)
            c_new = v_fill * pl.reciprocal(kr, approx=True)
            return r_new, c_new

        def cond(state):
            i, err, _, _ = state
            return jnp.logical_and(i < n_outer, err >= thresh)

        def body(state):
            i, _, r, c = state
            r_mid, c_mid = half_pair(r, c)            # pair 1 (no err check)
            r_new, c_new = half_pair(r_mid, c_mid)    # pair 2, check err once
            err = jnp.sum(jnp.abs(r_new - r_mid)) * inv_cnt
            return (i + 1, err, r_new, c_new)

        init = (jnp.zeros((), jnp.int32), jnp.full((), 1e30, jnp.float32),
                jnp.ones((BV, N), jnp.float32), jnp.ones((B, NT), jnp.float32))
        _, _, r, c = lax.while_loop(cond, body, init)

        # transport plan T = (r outer c) * K  (expanded only here)
        r_exp = jnp.dot(r, rep_t, preferred_element_type=f32)
        c_exp = jnp.dot(rep_b, c, preferred_element_type=f32)
        plan = r_exp * c_exp * K2

        nan_mask = (plan != plan).astype(f32)
        has_nan = jnp.max(nan_mask) > 0.0
        # TODO(synk): torch returns None when the plan still has NaNs; a fixed
        # shape kernel cannot express that branch -> fall back to T0 = K.
        plan = jnp.where(has_nan, K2, plan)

        # sim_op[b, n] = sum_{v,t} plan * sim; logit scale folded into s_t_out;
        # output lane-dense (N padded to 128) to avoid masked partial stores.
        ws = plan * sim
        out_ref[...] = jnp.dot(jnp.dot(s_v, ws, preferred_element_type=f32),
                               s_t_out_ref[...], preferred_element_type=f32)

    return kernel


# ----------------------------------------------------------------------------
# Parameters + CustomCLIP forward (glue in plain JAX, hot path in one kernel)
# ----------------------------------------------------------------------------

def init_params(key, cfg):
    N, T, V = cfg["n_cls"], cfg["text_prompts"], cfg["vision_prompts"]
    n_ctx, L = cfg["n_ctx"], cfg["seq_len"]
    ctx_dim, vis_dim, D = cfg["ctx_dim"], cfg["vis_dim"], cfg["embed_dim"]
    C, H, W = cfg["img_c"], cfg["img_h"], cfg["img_w"]
    suf = L - 1 - n_ctx

    ks = jax.random.split(key, 10)
    p = {}
    p["ctx"] = 0.02 * jax.random.normal(ks[0], (T, n_ctx, ctx_dim))
    p["token_prefix"] = 0.02 * jax.random.normal(ks[1], (N * T, 1, ctx_dim))
    p["token_suffix"] = 0.02 * jax.random.normal(ks[2], (N * T, suf, ctx_dim))
    p["proj_w"] = jax.random.normal(ks[3], (ctx_dim, vis_dim)) / np.sqrt(ctx_dim)
    p["proj_b"] = jnp.zeros((vis_dim,))
    # TODO(synk): compound_prompts_text / compound_prompt_projections feed only
    # the external CLIP transformer / ViT (stubbed), so they are omitted.
    p["pos_emb"] = 0.01 * jax.random.normal(ks[4], (L, ctx_dim))
    p["ln_g"] = jnp.ones((ctx_dim,))
    p["ln_b"] = jnp.zeros((ctx_dim,))
    p["text_proj"] = jax.random.normal(ks[5], (ctx_dim, D)) / np.sqrt(ctx_dim)
    p["img_w"] = jax.random.normal(ks[6], (C * H * W + vis_dim, D)) / np.sqrt(C * H * W)
    p["img_b"] = jnp.zeros((D,))
    p["logit_scale"] = jnp.asarray(np.log(1.0 / 0.07), jnp.float32)

    # synthetic tokenized prompts: SOT, ctx tokens, name tokens, EOT (argmax)
    tok = np.zeros((N * T, L), dtype=np.int32)
    tok[:, 0] = 49406
    for n in range(N):
        for t in range(T):
            row = n * T + t
            tok[row, 1:1 + n_ctx] = 400 + np.arange(n_ctx)
            name_len = 1 + (n % 3)
            tok[row, 1 + n_ctx:1 + n_ctx + name_len] = 500 + n
            tok[row, 1 + n_ctx + name_len] = 49407          # EOT token (max value)
    p["tokenized_prompts"] = jnp.asarray(tok)
    return p


def custom_clip_forward(params, image, cfg,
                        eps=0.1, max_iter=100, thresh=0.01):
    B, C, H, W = image.shape
    N, T, V = cfg["n_cls"], cfg["text_prompts"], cfg["vision_prompts"]
    n_ctx, L = cfg["n_ctx"], cfg["seq_len"]
    ctx_dim, vis_dim, D = cfg["ctx_dim"], cfg["vis_dim"], cfg["embed_dim"]
    assert V == T, "MMP image-prompt path assumes VISION == TEXT prompt count"
    CHW = C * H * W
    BV, NT = B * V, N * T
    N_pad = ((N + 127) // 128) * 128
    f32, bf16 = jnp.float32, jnp.bfloat16

    # ---------------- MultiModalPromptLearner (prompt assembly) ----------------
    ctx = params["ctx"]                                              # (T, n_ctx, ctx_dim)
    ctx_rows = ctx.reshape(T * n_ctx, ctx_dim)
    ctx_exp = jnp.broadcast_to(ctx[None], (N, T, n_ctx, ctx_dim)).reshape(
        NT, n_ctx, ctx_dim)
    prompts = jnp.concatenate(
        [params["token_prefix"], ctx_exp, params["token_suffix"]], axis=1)  # (NT, L, ctx_dim)

    # ---------------- TextEncoder prep -----------------------------------------
    # TODO(synk): CLIP text transformer is external; treated as identity, so
    # ln_final + text_projection are position-wise and only the EOT position
    # reaches the logits -> gather EOT rows here, process them in the kernel.
    eot = jnp.argmax(params["tokenized_prompts"], axis=-1)           # (NT,)
    x = prompts + params["pos_emb"][None]
    x_eot = x[jnp.arange(NT), eot]                                   # (NT, ctx_dim)

    # ---------------- image-encoder stub inputs --------------------------------
    pix = image.reshape(B, CHW)
    img_w_pix = params["img_w"][:CHW]                                # (CHW, D)
    img_w_ctx = params["img_w"][CHW:]                                # (vis_dim, D)

    # ---------------- packed / folded small operands ---------------------------
    ln_gb = jnp.stack([params["ln_g"], params["ln_b"]], axis=0)      # (2, ctx_dim)
    bias_total = (params["proj_b"] @ img_w_ctx + params["img_b"]).reshape(1, D)
    scale = jnp.exp(params["logit_scale"])

    # ---------------- thin 0/1 group / replication matrices --------------------
    avg = _group_mat(T, T * n_ctx, 1, n_ctx, 1.0 / n_ctx)            # mean over n_ctx
    rep_v = (np.arange(BV)[:, None] % V ==
             np.arange(V)[None, :]).astype(np.float32)               # (BV, V)
    ctx_avg_rep = jnp.asarray(rep_v @ avg, dtype=bf16)               # (BV, T*n_ctx)
    rep_b = jnp.asarray(_group_mat(BV, B, V, 1))                     # (BV, B)
    s_v = jnp.asarray(_group_mat(B, BV, 1, V))                       # (B, BV)
    s_t_np = _group_mat(NT, N, T, 1)
    s_t = jnp.asarray(s_t_np)                                        # (NT, N)
    rep_t = jnp.asarray(s_t_np.T)                                    # (N, NT)
    # exp(logit_scale) folded in; extra columns are zero padding (sliced on host)
    s_t_out = jnp.zeros((NT, N_pad), f32).at[:, :N].set(s_t * scale)

    kernel = _make_fused_kernel(B, V, N, T, eps, max_iter, thresh)
    vmem = pl.BlockSpec(memory_space=pltpu.MemorySpace.VMEM)

    out = pl.pallas_call(
        kernel,
        out_shape=jax.ShapeDtypeStruct((B, N_pad), f32),
        in_specs=[vmem] * 15,
        out_specs=vmem,
        compiler_params=pltpu.CompilerParams(vmem_limit_bytes=32 * 1024 * 1024),
    )(
        x_eot.astype(f32),
        ln_gb.astype(f32),
        params["text_proj"].astype(bf16),
        ctx_rows.astype(bf16),
        params["proj_w"].astype(bf16),
        pix.astype(bf16),
        img_w_pix.astype(bf16),
        img_w_ctx.astype(bf16),
        bias_total.astype(f32),
        ctx_avg_rep,
        rep_b, s_t, rep_t, s_v, s_t_out,
    )
    # inference mode (prompt_learner.training == False) -> return logits
    return out[:, :N]


# ----------------------------------------------------------------------------
if __name__ == "__main__":
    cfg = dict(
        n_cls=8, text_prompts=4, vision_prompts=4, n_ctx=4, seq_len=16,
        ctx_dim=32, vis_dim=48, embed_dim=32, img_c=3, img_h=16, img_w=16,
    )
    key = jax.random.PRNGKey(0)
    k_img, k_par = jax.random.split(key)
    params = init_params(k_par, cfg)
    image = jax.random.normal(
        k_img, (2, cfg["img_c"], cfg["img_h"], cfg["img_w"]), jnp.float32)

    logits = custom_clip_forward(params, image, cfg)
    logits = jax.block_until_ready(logits)

    assert logits.shape == (2, cfg["n_cls"])
    assert bool(jnp.all(jnp.isfinite(logits)))
    print("KERNEL_OK")
</pallas_src>

<mosaic_0001>
module attributes {stable_mosaic.version = 11 : i64} {
  func.func @kernel(%arg0: memref<32x32xf32, #tpu.memory_space<vmem>>, %arg1: memref<2x32xf32, #tpu.memory_space<vmem>>, %arg2: memref<32x32xbf16, #tpu.memory_space<vmem>>, %arg3: memref<16x32xbf16, #tpu.memory_space<vmem>>, %arg4: memref<32x48xbf16, #tpu.memory_space<vmem>>, %arg5: memref<2x768xbf16, #tpu.memory_space<vmem>>, %arg6: memref<768x32xbf16, #tpu.memory_space<vmem>>, %arg7: memref<48x32xbf16, #tpu.memory_space<vmem>>, %arg8: memref<1x32xf32, #tpu.memory_space<vmem>>, %arg9: memref<8x16xbf16, #tpu.memory_space<vmem>>, %arg10: memref<8x2xf32, #tpu.memory_space<vmem>>, %arg11: memref<32x8xf32, #tpu.memory_space<vmem>>, %arg12: memref<8x32xf32, #tpu.memory_space<vmem>>, %arg13: memref<2x8xf32, #tpu.memory_space<vmem>>, %arg14: memref<32x128xf32, #tpu.memory_space<vmem>>, %arg15: memref<2x128xf32, #tpu.memory_space<vmem>>) attributes {dimension_semantics = [], scalar_prefetch = 0 : i64, scratch_operands = 0 : i64, tpu.core_type = #tpu.core_type<tc>} {
    %c0 = arith.constant 0 : index
    %c0_0 = arith.constant 0 : index
    %0 = vector.load %arg0[%c0, %c0_0] : memref<32x32xf32, #tpu.memory_space<vmem>>, vector<32x32xf32>
    %c0_1 = arith.constant 0 : index
    %c0_2 = arith.constant 0 : index
    %1 = vector.load %arg1[%c0_1, %c0_2] : memref<2x32xf32, #tpu.memory_space<vmem>>, vector<2x32xf32>
    %cst = arith.constant dense<0.000000e+00> : vector<32xf32>
    %2 = vector.multi_reduction <add>, %0, %cst [1] : vector<32x32xf32> to vector<32xf32>
    %3 = vector.shape_cast %2 : vector<32xf32> to vector<32x1xf32>
    %cst_3 = arith.constant 3.200000e+01 : f32
    %4 = vector.broadcast %cst_3 : f32 to vector<32x1xf32>
    %5 = arith.divf %3, %4 : vector<32x1xf32>
    %6 = vector.broadcast %5 : vector<32x1xf32> to vector<32x32xf32>
    %7 = arith.subf %0, %6 : vector<32x32xf32>
    %8 = arith.mulf %7, %7 : vector<32x32xf32>
    %cst_4 = arith.constant dense<0.000000e+00> : vector<32xf32>
    %9 = vector.multi_reduction <add>, %8, %cst_4 [1] : vector<32x32xf32> to vector<32xf32>
    %10 = vector.shape_cast %9 : vector<32xf32> to vector<32x1xf32>
    %cst_5 = arith.constant 3.200000e+01 : f32
    %11 = vector.broadcast %cst_5 : f32 to vector<32x1xf32>
    %12 = arith.divf %10, %11 : vector<32x1xf32>
    %cst_6 = arith.constant 9.99999974E-6 : f32
    %13 = vector.broadcast %cst_6 : f32 to vector<32x1xf32>
    %14 = arith.addf %12, %13 : vector<32x1xf32>
    %15 = math.rsqrt %14 : vector<32x1xf32>
    %16 = vector.broadcast %15 : vector<32x1xf32> to vector<32x32xf32>
    %17 = arith.mulf %7, %16 : vector<32x32xf32>
    %18 = vector.extract_strided_slice %1 {offsets = [0, 0], sizes = [1, 32], strides = [1, 1]} : vector<2x32xf32> to vector<1x32xf32>
    %19 = vector.broadcast %18 : vector<1x32xf32> to vector<32x32xf32>
    %20 = arith.mulf %17, %19 : vector<32x32xf32>
    %21 = vector.extract_strided_slice %1 {offsets = [1, 0], sizes = [1, 32], strides = [1, 1]} : vector<2x32xf32> to vector<1x32xf32>
    %22 = vector.broadcast %21 : vector<1x32xf32> to vector<32x32xf32>
    %23 = arith.addf %20, %22 : vector<32x32xf32>
    %24 = arith.truncf %23 : vector<32x32xf32> to vector<32x32xbf16>
    %c0_7 = arith.constant 0 : index
    %c0_8 = arith.constant 0 : index
    %25 = vector.load %arg2[%c0_7, %c0_8] : memref<32x32xbf16, #tpu.memory_space<vmem>>, vector<32x32xbf16>
    %cst_9 = arith.constant dense<0.000000e+00> : vector<32x32xf32>
    %26 = tpu.matmul %24, %25, %cst_9 {dimension_numbers = #tpu.dot_dimension_numbers<[1], [0], [0], [1], [0, 0, 1, 1], [], []>} : vector<32x32xbf16>, vector<32x32xbf16>, vector<32x32xf32> -> vector<32x32xf32>
    %27 = arith.mulf %26, %26 : vector<32x32xf32>
    %cst_10 = arith.constant dense<0.000000e+00> : vector<32xf32>
    %28 = vector.multi_reduction <add>, %27, %cst_10 [1] : vector<32x32xf32> to vector<32xf32>
    %29 = vector.shape_cast %28 : vector<32xf32> to vector<32x1xf32>
    %30 = math.rsqrt %29 : vector<32x1xf32>
    %31 = vector.broadcast %30 : vector<32x1xf32> to vector<32x32xf32>
    %32 = arith.mulf %26, %31 : vector<32x32xf32>
    %c0_11 = arith.constant 0 : index
    %c0_12 = arith.constant 0 : index
    %33 = vector.load %arg3[%c0_11, %c0_12] : memref<16x32xbf16, #tpu.memory_space<vmem>>, vector<16x32xbf16>
    %c0_13 = arith.constant 0 : index
    %c0_14 = arith.constant 0 : index
    %34 = vector.load %arg4[%c0_13, %c0_14] : memref<32x48xbf16, #tpu.memory_space<vmem>>, vector<32x48xbf16>
    %cst_15 = arith.constant dense<0.000000e+00> : vector<16x48xf32>
    %35 = tpu.matmul %33, %34, %cst_15 {dimension_numbers = #tpu.dot_dimension_numbers<[1], [0], [0], [1], [0, 0, 1, 1], [], []>} : vector<16x32xbf16>, vector<32x48xbf16>, vector<16x48xf32> -> vector<16x48xf32>
    %c0_16 = arith.constant 0 : index
    %c0_17 = arith.constant 0 : index
    %36 = vector.load %arg9[%c0_16, %c0_17] : memref<8x16xbf16, #tpu.memory_space<vmem>>, vector<8x16xbf16>
    %37 = arith.truncf %35 : vector<16x48xf32> to vector<16x48xbf16>
    %cst_18 = arith.constant dense<0.000000e+00> : vector<8x48xf32>
    %38 = tpu.matmul %36, %37, %cst_18 {dimension_numbers = #tpu.dot_dimension_numbers<[1], [0], [0], [1], [0, 0, 1, 1], [], []>} : vector<8x16xbf16>, vector<16x48xbf16>, vector<8x48xf32> -> vector<8x48xf32>
    %39 = arith.truncf %38 : vector<8x48xf32> to vector<8x48xbf16>
    %c0_19 = arith.constant 0 : index
    %c0_20 = arith.constant 0 : index
    %40 = vector.load %arg7[%c0_19, %c0_20] : memref<48x32xbf16, #tpu.memory_space<vmem>>, vector<48x32xbf16>
    %cst_21 = arith.constant dense<0.000000e+00> : vector<8x32xf32>
    %41 = tpu.matmul %39, %40, %cst_21 {dimension_numbers = #tpu.dot_dimension_numbers<[1], [0], [0], [1], [0, 0, 1, 1], [], []>} : vector<8x48xbf16>, vector<48x32xbf16>, vector<8x32xf32> -> vector<8x32xf32>
    %c0_22 = arith.constant 0 : index
    %c0_23 = arith.constant 0 : index
    %42 = vector.load %arg5[%c0_22, %c0_23] : memref<2x768xbf16, #tpu.memory_space<vmem>>, vector<2x768xbf16>
    %c0_24 = arith.constant 0 : index
    %c0_25 = arith.constant 0 : index
    %43 = vector.load %arg6[%c0_24, %c0_25] : memref<768x32xbf16, #tpu.memory_space<vmem>>, vector<768x32xbf16>
    %cst_26 = arith.constant dense<0.000000e+00> : vector<2x32xf32>
    %44 = tpu.matmul %42, %43, %cst_26 {dimension_numbers = #tpu.dot_dimension_numbers<[1], [0], [0], [1], [0, 0, 1, 1], [], []>} : vector<2x768xbf16>, vector<768x32xbf16>, vector<2x32xf32> -> vector<2x32xf32>
    %c0_27 = arith.constant 0 : index
    %c0_28 = arith.constant 0 : index
    %45 = vector.load %arg10[%c0_27, %c0_28] : memref<8x2xf32, #tpu.memory_space<vmem>>, vector<8x2xf32>
    %cst_29 = arith.constant dense<0.000000e+00> : vector<8x32xf32>
    %46 = tpu.matmul %45, %44, %cst_29 {dimension_numbers = #tpu.dot_dimension_numbers<[1], [0], [0], [1], [0, 0, 1, 1], [], []>} : vector<8x2xf32>, vector<2x32xf32>, vector<8x32xf32> -> vector<8x32xf32>
    %47 = arith.addf %46, %41 : vector<8x32xf32>
    %c0_30 = arith.constant 0 : index
    %c0_31 = arith.constant 0 : index
    %48 = vector.load %arg8[%c0_30, %c0_31] : memref<1x32xf32, #tpu.memory_space<vmem>>, vector<1x32xf32>
    %49 = vector.broadcast %48 : vector<1x32xf32> to vector<8x32xf32>
    %50 = arith.addf %47, %49 : vector<8x32xf32>
    %51 = arith.mulf %50, %50 : vector<8x32xf32>
    %cst_32 = arith.constant dense<0.000000e+00> : vector<8xf32>
    %52 = vector.multi_reduction <add>, %51, %cst_32 [1] : vector<8x32xf32> to vector<8xf32>
    %53 = vector.shape_cast %52 : vector<8xf32> to vector<8x1xf32>
    %54 = math.rsqrt %53 : vector<8x1xf32>
    %55 = vector.broadcast %54 : vector<8x1xf32> to vector<8x32xf32>
    %56 = arith.mulf %50, %55 : vector<8x32xf32>
    %57 = arith.truncf %56 : vector<8x32xf32> to vector<8x32xbf16>
    %58 = arith.truncf %32 : vector<32x32xf32> to vector<32x32xbf16>
    %cst_33 = arith.constant dense<0.000000e+00> : vector<8x32xf32>
    %59 = tpu.matmul %57, %58, %cst_33 {dimension_numbers = #tpu.dot_dimension_numbers<[1], [1], [0], [0], [0, 0, 1, 0], [], []>} : vector<8x32xbf16>, vector<32x32xbf16>, vector<8x32xf32> -> vector<8x32xf32>
    %cst_34 = arith.constant 1.000000e+00 : f32
    %60 = vector.broadcast %cst_34 : f32 to vector<8x32xf32>
    %61 = arith.subf %59, %60 : vector<8x32xf32>
    %cst_35 = arith.constant 1.000000e+01 : f32
    %62 = vector.broadcast %cst_35 : f32 to vector<8x32xf32>
    %63 = arith.mulf %61, %62 : vector<8x32xf32>
    %64 = math.exp %63 : vector<8x32xf32>
    %c0_36 = arith.constant 0 : index
    %c0_37 = arith.constant 0 : index
    %65 = vector.load %arg10[%c0_36, %c0_37] : memref<8x2xf32, #tpu.memory_space<vmem>>, vector<8x2xf32>
    %c0_38 = arith.constant 0 : index
    %c0_39 = arith.constant 0 : index
    %66 = vector.load %arg11[%c0_38, %c0_39] : memref<32x8xf32, #tpu.memory_space<vmem>>, vector<32x8xf32>
    %c0_40 = arith.constant 0 : index
    %c0_41 = arith.constant 0 : index
    %67 = vector.load %arg12[%c0_40, %c0_41] : memref<8x32xf32, #tpu.memory_space<vmem>>, vector<8x32xf32>
    %c0_42 = arith.constant 0 : index
    %c0_43 = arith.constant 0 : index
    %68 = vector.load %arg13[%c0_42, %c0_43] : memref<2x8xf32, #tpu.memory_space<vmem>>, vector<2x8xf32>
    %cst_44 = arith.constant 1.000000e+00 : f32
    %69 = vector.broadcast %cst_44 : f32 to vector<8x8xf32>
    %cst_45 = arith.constant 1.000000e+00 : f32
    %70 = vector.broadcast %cst_45 : f32 to vector<2x32xf32>
    %c0_i32 = arith.constant 0 : i32
    %cst_46 = arith.constant 1.000000e+30 : f32
    %71:4 = scf.while (%arg16 = %c0_i32, %arg17 = %cst_46, %arg18 = %69, %arg19 = %70) : (i32, f32, vector<8x8xf32>, vector<2x32xf32>) -> (i32, f32, vector<8x8xf32>, vector<2x32xf32>) {
      %c50_i32 = arith.constant 50 : i32
      %90 = arith.cmpi slt, %arg16, %c50_i32 : i32
      %cst_57 = arith.constant 0.00999999977 : f32
      %91 = arith.cmpf oge, %arg17, %cst_57 : f32
      %92 = arith.andi %90, %91 : i1
      scf.condition(%92) %arg16, %arg17, %arg18, %arg19 : i32, f32, vector<8x8xf32>, vector<2x32xf32>
    } do {
    ^bb0(%arg16: i32, %arg17: f32, %arg18: vector<8x8xf32>, %arg19: vector<2x32xf32>):
      %cst_57 = arith.constant dense<0.000000e+00> : vector<8x32xf32>
      %90 = tpu.matmul %65, %arg19, %cst_57 {dimension_numbers = #tpu.dot_dimension_numbers<[1], [0], [0], [1], [0, 0, 1, 1], [], []>} : vector<8x2xf32>, vector<2x32xf32>, vector<8x32xf32> -> vector<8x32xf32>
      %91 = arith.mulf %64, %90 : vector<8x32xf32>
      %cst_58 = arith.constant dense<0.000000e+00> : vector<8x8xf32>
      %92 = tpu.matmul %91, %66, %cst_58 {dimension_numbers = #tpu.dot_dimension_numbers<[1], [0], [0], [1], [0, 0, 1, 1], [], []>} : vector<8x32xf32>, vector<32x8xf32>, vector<8x8xf32> -> vector<8x8xf32>
      %93 = tpu.reciprocal %92 {approx = true} : vector<8x8xf32> -> vector<8x8xf32>
      %cst_59 = arith.constant 2.500000e-01 : f32
      %94 = vector.broadcast %cst_59 : f32 to vector<8x8xf32>
      %95 = arith.mulf %94, %93 : vector<8x8xf32>
      %cst_60 = arith.constant dense<0.000000e+00> : vector<8x32xf32>
      %96 = tpu.matmul %95, %67, %cst_60 {dimension_numbers = #tpu.dot_dimension_numbers<[1], [0], [0], [1], [0, 0, 1, 1], [], []>} : vector<8x8xf32>, vector<8x32xf32>, vector<8x32xf32> -> vector<8x32xf32>
      %97 = arith.mulf %64, %96 : vector<8x32xf32>
      %cst_61 = arith.constant dense<0.000000e+00> : vector<2x32xf32>
      %98 = tpu.matmul %68, %97, %cst_61 {dimension_numbers = #tpu.dot_dimension_numbers<[1], [0], [0], [1], [0, 0, 1, 1], [], []>} : vector<2x8xf32>, vector<8x32xf32>, vector<2x32xf32> -> vector<2x32xf32>
      %99 = tpu.reciprocal %98 {approx = true} : vector<2x32xf32> -> vector<2x32xf32>
      %cst_62 = arith.constant 2.500000e-01 : f32
      %100 = vector.broadcast %cst_62 : f32 to vector<2x32xf32>
      %101 = arith.mulf %100, %99 : vector<2x32xf32>
      %cst_63 = arith.constant dense<0.000000e+00> : vector<8x32xf32>
      %102 = tpu.matmul %65, %101, %cst_63 {dimension_numbers = #tpu.dot_dimension_numbers<[1], [0], [0], [1], [0, 0, 1, 1], [], []>} : vector<8x2xf32>, vector<2x32xf32>, vector<8x32xf32> -> vector<8x32xf32>
      %103 = arith.mulf %64, %102 : vector<8x32xf32>
      %cst_64 = arith.constant dense<0.000000e+00> : vector<8x8xf32>
      %104 = tpu.matmul %103, %66, %cst_64 {dimension_numbers = #tpu.dot_dimension_numbers<[1], [0], [0], [1], [0, 0, 1, 1], [], []>} : vector<8x32xf32>, vector<32x8xf32>, vector<8x8xf32> -> vector<8x8xf32>
      %105 = tpu.reciprocal %104 {approx = true} : vector<8x8xf32> -> vector<8x8xf32>
      %cst_65 = arith.constant 2.500000e-01 : f32
      %106 = vector.broadcast %cst_65 : f32 to vector<8x8xf32>
      %107 = arith.mulf %106, %105 : vector<8x8xf32>
      %cst_66 = arith.constant dense<0.000000e+00> : vector<8x32xf32>
      %108 = tpu.matmul %107, %67, %cst_66 {dimension_numbers = #tpu.dot_dimension_numbers<[1], [0], [0], [1], [0, 0, 1, 1], [], []>} : vector<8x8xf32>, vector<8x32xf32>, vector<8x32xf32> -> vector<8x32xf32>
      %109 = arith.mulf %64, %108 : vector<8x32xf32>
      %cst_67 = arith.constant dense<0.000000e+00> : vector<2x32xf32>
      %110 = tpu.matmul %68, %109, %cst_67 {dimension_numbers = #tpu.dot_dimension_numbers<[1], [0], [0], [1], [0, 0, 1, 1], [], []>} : vector<2x8xf32>, vector<8x32xf32>, vector<2x32xf32> -> vector<2x32xf32>
      %111 = tpu.reciprocal %110 {approx = true} : vector<2x32xf32> -> vector<2x32xf32>
      %cst_68 = arith.constant 2.500000e-01 : f32
      %112 = vector.broadcast %cst_68 : f32 to vector<2x32xf32>
      %113 = arith.mulf %112, %111 : vector<2x32xf32>
      %114 = arith.subf %107, %95 : vector<8x8xf32>
      %115 = math.absf %114 : vector<8x8xf32>
      %116 = vector.shape_cast %115 : vector<8x8xf32> to vector<1x8x8xf32>
      %cst_69 = arith.constant dense<0.000000e+00> : vector<1xf32>
      %117 = vector.multi_reduction <add>, %116, %cst_69 [1, 2] : vector<1x8x8xf32> to vector<1xf32>
      %118 = vector.shape_cast %117 : vector<1xf32> to vector<1x1x1xf32>
      %119 = vector.extract %118[0, 0, 0] : f32 from vector<1x1x1xf32>
      %cst_70 = arith.constant 1.562500e-02 : f32
      %120 = arith.mulf %119, %cst_70 : f32
      %c1_i32 = arith.constant 1 : i32
      %121 = arith.addi %arg16, %c1_i32 : i32
      scf.yield %121, %120, %107, %113 : i32, f32, vector<8x8xf32>, vector<2x32xf32>
    }
    %cst_47 = arith.constant dense<0.000000e+00> : vector<8x32xf32>
    %72 = tpu.matmul %71#2, %67, %cst_47 {dimension_numbers = #tpu.dot_dimension_numbers<[1], [0], [0], [1], [0, 0, 1, 1], [], []>} : vector<8x8xf32>, vector<8x32xf32>, vector<8x32xf32> -> vector<8x32xf32>
    %cst_48 = arith.constant dense<0.000000e+00> : vector<8x32xf32>
    %73 = tpu.matmul %65, %71#3, %cst_48 {dimension_numbers = #tpu.dot_dimension_numbers<[1], [0], [0], [1], [0, 0, 1, 1], [], []>} : vector<8x2xf32>, vector<2x32xf32>, vector<8x32xf32> -> vector<8x32xf32>
    %74 = arith.mulf %72, %73 : vector<8x32xf32>
    %75 = arith.mulf %74, %64 : vector<8x32xf32>
    %76 = arith.cmpf one, %75, %75 : vector<8x32xf32>
    %77 = arith.extui %76 : vector<8x32xi1> to vector<8x32xi32>
    %78 = arith.sitofp %77 : vector<8x32xi32> to vector<8x32xf32>
    %79 = vector.shape_cast %78 : vector<8x32xf32> to vector<1x8x32xf32>
    %cst_49 = arith.constant dense<0xFF800000> : vector<1xf32>
    %80 = vector.multi_reduction <maximumf>, %79, %cst_49 [1, 2] : vector<1x8x32xf32> to vector<1xf32>
    %81 = vector.shape_cast %80 : vector<1xf32> to vector<1x1x1xf32>
    %82 = vector.extract %81[0, 0, 0] : f32 from vector<1x1x1xf32>
    %cst_50 = arith.constant 0.000000e+00 : f32
    %83 = arith.cmpf ogt, %82, %cst_50 : f32
    %84 = arith.select %83, %64, %75 : vector<8x32xf32>
    %85 = arith.mulf %84, %59 : vector<8x32xf32>
    %cst_51 = arith.constant dense<0.000000e+00> : vector<2x32xf32>
    %86 = tpu.matmul %68, %85, %cst_51 {dimension_numbers = #tpu.dot_dimension_numbers<[1], [0], [0], [1], [0, 0, 1, 1], [], []>} : vector<2x8xf32>, vector<8x32xf32>, vector<2x32xf32> -> vector<2x32xf32>
    %c0_52 = arith.constant 0 : index
    %c0_53 = arith.constant 0 : index
    %87 = vector.load %arg14[%c0_52, %c0_53] : memref<32x128xf32, #tpu.memory_space<vmem>>, vector<32x128xf32>
    %cst_54 = arith.constant dense<0.000000e+00> : vector<2x128xf32>
    %88 = tpu.matmul %86, %87, %cst_54 {dimension_numbers = #tpu.dot_dimension_numbers<[1], [0], [0], [1], [0, 0, 1, 1], [], []>} : vector<2x32xf32>, vector<32x128xf32>, vector<2x128xf32> -> vector<2x128xf32>
    %c0_55 = arith.constant 0 : index
    %c0_56 = arith.constant 0 : index
    %89 = vector.load %arg15[%c0_55, %c0_56] : memref<2x128xf32, #tpu.memory_space<vmem>>, vector<2x128xf32>
    tpu.vector_store %arg15[%c0_55, %c0_56], %88 {strides = array<i32>} : memref<2x128xf32, #tpu.memory_space<vmem>>, vector<2x128xf32>,
    return
  }
}

</mosaic_0001>

<llo_original>
// kernel: tpu_custom_call.1
$region0: #{tpu_custom_call.1}
  #allocation0 [shape = 'u32[]', space=smem, size = 0x4, offset = 0x4, fixed_abs, tag = 'smem constant byte address 0x4 - core index']
  #allocation1 [shape = 'u32[144,128]{1,0:T(1,128)}', space=vmem, size = 0x12000, scoped, tag = 'internal scratch']
  %s0 = inlined_call_operand.vmem [shape: f32[32,32], index: 0, kind: input, shape index: {}]
  %s1 = inlined_call_operand.vmem [shape: f32[2,32], index: 1, kind: input, shape index: {}]
  %s2 = inlined_call_operand.vmem [shape: bf16[32,32], index: 2, kind: input, shape index: {}]
  %s3 = inlined_call_operand.vmem [shape: bf16[16,32], index: 3, kind: input, shape index: {}]
  %s4 = inlined_call_operand.vmem [shape: bf16[32,48], index: 4, kind: input, shape index: {}]
  %s5 = inlined_call_operand.vmem [shape: bf16[2,768], index: 5, kind: input, shape index: {}]
  %s6 = inlined_call_operand.vmem [shape: bf16[768,32], index: 6, kind: input, shape index: {}]
  %s7 = inlined_call_operand.vmem [shape: bf16[48,32], index: 7, kind: input, shape index: {}]
  %s8 = inlined_call_operand.vmem [shape: f32[1,32], index: 8, kind: input, shape index: {}]
  %s9 = inlined_call_operand.vmem [shape: bf16[8,16], index: 9, kind: input, shape index: {}]
  %s10 = inlined_call_operand.vmem [shape: f32[8,2], index: 10, kind: input, shape index: {}]
  %s11 = inlined_call_operand.vmem [shape: f32[32,8], index: 11, kind: input, shape index: {}]
  %s12 = inlined_call_operand.vmem [shape: f32[8,32], index: 12, kind: input, shape index: {}]
  %s13 = inlined_call_operand.vmem [shape: f32[2,8], index: 13, kind: input, shape index: {}]
  %s14 = inlined_call_operand.vmem [shape: f32[32,128], index: 14, kind: input, shape index: {}]
  %s15 = inlined_call_operand.hbm [shape: f32[2,128], index: 15, kind: output, shape index: {}]
  %s16 = sld [smem:[#allocation0]]
  $region77: #{tpu_custom_call.1} parent=0
    _
  %s18 = ssub.s32 1, %s16
  %s19 = scalar_select 0, %s18, %s16
  $region1: #{tpu_custom_call.1} parent=0
    #allocation2 [shape = 'u8[1024]{0}', space=vmem, size = 0x400, scoped, tag = 'output window, operand 0, single buffered']
    #allocation3 [shape = 's32[1]{0}', space=sflag, size = 0x4, scoped, tag = 'scoped memory for tpu_custom_call.1']
    %20 = vsyncpa [#allocation3], 0
    // Predicated region
    $region2: #{tpu_custom_call.1} parent=1 // pred_check
      _
    $region3: #{tpu_custom_call.1} parent=1 // pred_check_branch
      %22 = sbr.rel (0) target = $region5
    $region4: #{tpu_custom_call.1} parent=1 // pred_region
      _
    $region5: #{tpu_custom_call.1} parent=1 // pred_fallthru
      _
    // Predicated region
    $region6: #{tpu_custom_call.1} parent=1 // pred_check
      _
    $region7: #{tpu_custom_call.1} parent=1 // pred_check_branch
      %24 = sbr.rel (0) target = $region9
    $region8: #{tpu_custom_call.1} parent=1 // pred_region
      _
    $region9: #{tpu_custom_call.1} parent=1 // pred_fallthru
      _
    // Predicated region
    $region10: #{tpu_custom_call.1} parent=1 // pred_check
      _
    $region11: #{tpu_custom_call.1} parent=1 // pred_check_branch
      %26 = sbr.rel (0) target = $region13
    $region12: #{tpu_custom_call.1} parent=1 // pred_region
      _
    $region13: #{tpu_custom_call.1} parent=1 // pred_fallthru
      _
    // Predicated region
    $region14: #{tpu_custom_call.1} parent=1 // pred_check
      _
    $region15: #{tpu_custom_call.1} parent=1 // pred_check_branch
      %28 = sbr.rel (0) target = $region17
    $region16: #{tpu_custom_call.1} parent=1 // pred_region
      _
    $region17: #{tpu_custom_call.1} parent=1 // pred_fallthru
      _
    // Predicated region
    $region18: #{tpu_custom_call.1} parent=1 // pred_check
      _
    $region19: #{tpu_custom_call.1} parent=1 // pred_check_branch
      %30 = sbr.rel (0) target = $region21
    $region20: #{tpu_custom_call.1} parent=1 // pred_region
      _
    $region21: #{tpu_custom_call.1} parent=1 // pred_fallthru
      _
    // Predicated region
    $region22: #{tpu_custom_call.1} parent=1 // pred_check
      _
    $region23: #{tpu_custom_call.1} parent=1 // pred_check_branch
      %32 = sbr.rel (0) target = $region25
    $region24: #{tpu_custom_call.1} parent=1 // pred_region
      _
    $region25: #{tpu_custom_call.1} parent=1 // pred_fallthru
      _
    // Predicated region
    $region26: #{tpu_custom_call.1} parent=1 // pred_check
      _
    $region27: #{tpu_custom_call.1} parent=1 // pred_check_branch
      %34 = sbr.rel (0) target = $region29
    $region28: #{tpu_custom_call.1} parent=1 // pred_region
      _
    $region29: #{tpu_custom_call.1} parent=1 // pred_fallthru
      _
    // Predicated region
    $region30: #{tpu_custom_call.1} parent=1 // pred_check
      _
    $region31: #{tpu_custom_call.1} parent=1 // pred_check_branch
      %36 = sbr.rel (0) target = $region33
    $region32: #{tpu_custom_call.1} parent=1 // pred_region
      _
    $region33: #{tpu_custom_call.1} parent=1 // pred_fallthru
      _
    // Predicated region
    $region34: #{tpu_custom_call.1} parent=1 // pred_check
      _
    $region35: #{tpu_custom_call.1} parent=1 // pred_check_branch
      %38 = sbr.rel (0) target = $region37
    $region36: #{tpu_custom_call.1} parent=1 // pred_region
      _
    $region37: #{tpu_custom_call.1} parent=1 // pred_fallthru
      _
    // Predicated region
    $region38: #{tpu_custom_call.1} parent=1 // pred_check
      _
    $region39: #{tpu_custom_call.1} parent=1 // pred_check_branch
      %40 = sbr.rel (0) target = $region41
    $region40: #{tpu_custom_call.1} parent=1 // pred_region
      _
    $region41: #{tpu_custom_call.1} parent=1 // pred_fallthru
      _
    // Predicated region
    $region42: #{tpu_custom_call.1} parent=1 // pred_check
      _
    $region43: #{tpu_custom_call.1} parent=1 // pred_check_branch
      %42 = sbr.rel (0) target = $region45
    $region44: #{tpu_custom_call.1} parent=1 // pred_region
      _
    $region45: #{tpu_custom_call.1} parent=1 // pred_fallthru
      _
    // Predicated region
    $region46: #{tpu_custom_call.1} parent=1 // pred_check
      _
    $region47: #{tpu_custom_call.1} parent=1 // pred_check_branch
      %44 = sbr.rel (0) target = $region49
    $region48: #{tpu_custom_call.1} parent=1 // pred_region
      _
    $region49: #{tpu_custom_call.1} parent=1 // pred_fallthru
      _
    // Predicated region
    $region50: #{tpu_custom_call.1} parent=1 // pred_check
      _
    $region51: #{tpu_custom_call.1} parent=1 // pred_check_branch
      %46 = sbr.rel (0) target = $region53
    $region52: #{tpu_custom_call.1} parent=1 // pred_region
      _
    $region53: #{tpu_custom_call.1} parent=1 // pred_fallthru
      _
    // Predicated region
    $region54: #{tpu_custom_call.1} parent=1 // pred_check
      _
    $region55: #{tpu_custom_call.1} parent=1 // pred_check_branch
      %48 = sbr.rel (0) target = $region57
    $region56: #{tpu_custom_call.1} parent=1 // pred_region
      _
    $region57: #{tpu_custom_call.1} parent=1 // pred_fallthru
      _
    // Predicated region
    $region58: #{tpu_custom_call.1} parent=1 // pred_check
      _
    $region59: #{tpu_custom_call.1} parent=1 // pred_check_branch
      %50 = sbr.rel (0) target = $region61
    $region60: #{tpu_custom_call.1} parent=1 // pred_region
      _
    $region61: #{tpu_custom_call.1} parent=1 // pred_fallthru
      _
    %v52 = vld [vmem:[%s0] sm:$0xff]
    %v53 = vld [vmem:[%s0 + $0x8] sm:$0xff]
    %v54 = vld [vmem:[%s0 + $0x10] sm:$0xff]
    %v55 = vld [vmem:[%s0 + $0x18] sm:$0xff]
    %v56 = vld [vmem:[%s1] sm:$0x3]
    %vm57 = vcmask 261120
    %v58 = vsel %vm57, %v52, 0.0
    %59 = vadd.xlane.f32.xlu0 %v58
    %v60 = vpop.xlane.xlu0 %59
    %v61 = vsel %vm57, %v53, 0.0
    %62 = vadd.xlane.f32.xlu0 %v61
    %v63 = vpop.xlane.xlu0 %62
    %v64 = vsel %vm57, %v54, 0.0
    %65 = vadd.xlane.f32.xlu0 %v64
    %v66 = vpop.xlane.xlu0 %65
    %v67 = vsel %vm57, %v55, 0.0
    %68 = vadd.xlane.f32.xlu0 %v67
    %v69 = vpop.xlane.xlu0 %68
    %v70 = vrcp.pop 32.0
    %v71 = vmul.f32 %v60, %v70
    %v72 = vmul.f32 %v63, %v70
    %v73 = vmul.f32 %v66, %v70
    %v74 = vmul.f32 %v69, %v70
    %v75 = vsub.f32 %v52, %v71
    %v76 = vsub.f32 %v53, %v72
    %v77 = vsub.f32 %v54, %v73
    %v78 = vsub.f32 %v55, %v74
    %v79 = vmul.f32 %v75, %v75
    %v80 = vmul.f32 %v76, %v76
    %v81 = vmul.f32 %v77, %v77
    %v82 = vmul.f32 %v78, %v78
    %v83 = vsel %vm57, %v79, 0.0
    %84 = vadd.xlane.f32.xlu0 %v83
    %v85 = vpop.xlane.xlu0 %84
    %v86 = vsel %vm57, %v80, 0.0
    %87 = vadd.xlane.f32.xlu0 %v86
    %v88 = vpop.xlane.xlu0 %87
    %v89 = vsel %vm57, %v81, 0.0
    %90 = vadd.xlane.f32.xlu0 %v89
    %v91 = vpop.xlane.xlu0 %90
    %v92 = vsel %vm57, %v82, 0.0
    %93 = vadd.xlane.f32.xlu0 %v92
    %v94 = vpop.xlane.xlu0 %93
    %v95 = vmul.f32 %v85, %v70
    %v96 = vmul.f32 %v88, %v70
    %v97 = vmul.f32 %v91, %v70
    %v98 = vmul.f32 %v94, %v70
    %v99 = vadd.f32 %v95, 1e-05
    %v100 = vadd.f32 %v96, 1e-05
    %v101 = vadd.f32 %v97, 1e-05
    %v102 = vadd.f32 %v98, 1e-05
    %v103 = vrsqrt.pop %v99
    %v104 = vrsqrt.pop %v100
    %v105 = vrsqrt.pop %v101
    %v106 = vrsqrt.pop %v102
    %v107 = vmul.f32 %v75, %v103
    %v108 = vmul.f32 %v76, %v104
    %v109 = vmul.f32 %v77, %v105
    %v110 = vmul.f32 %v78, %v106
    %v111 = vlaneseq
    %v112 = vshrl.u32 %v111, 7
    %v113 = vsub.s32 0, %v112
    %v114 = vrot.slane %v56, %v113
    %v115 = vmul.f32 %v107, %v114
    %v116 = vmul.f32 %v108, %v114
    %v117 = vmul.f32 %v109, %v114
    %v118 = vmul.f32 %v110, %v114
    %v119 = vlaneseq
    %v120 = vshrl.u32 %v119, 7
    %v121 = vsub.s32 1, %v120
    %v122 = vrot.slane %v56, %v121
    %v123 = vadd.f32 %v115, %v122
    %v124 = vadd.f32 %v116, %v122
    %v125 = vadd.f32 %v117, %v122
    %v126 = vadd.f32 %v118, %v122
    %v127 = vpack.c.bf16 %v124, %v123
    %v128 = vpack.c.bf16 %v126, %v125
    %v129 = vld [vmem:[%s2] sm:$0xf]
    %v130 = vld [vmem:[%s2 + $0x4] sm:$0xf]
    %v131 = vld [vmem:[%s2 + $0x8] sm:$0xf]
    %v132 = vld [vmem:[%s2 + $0xc] sm:$0xf]
    %v137 = vunpack.c.l.b16 %v129
    %v138 = vunpack.c.l.b16 %v130
    %v139 = vunpack.c.l.b16 %v131
    %v140 = vunpack.c.l.b16 %v132
    %v141 = vpack.c.b16 %v138, %v137
    %v142 = vpack.c.b16 %v140, %v139
    %v146 = vsel %vm57, %v127, 0
    %v149 = vsel %vm57, %v128, 0
    %151 = vmatprep.subr.bf16.mxu0 0
    %152 = vmatpush1.bf16.msra.mxu0 0
    %153 = vmatprep.subr.bf16.mxu0 0
    %154 = vmatpush1.bf16.msra.mxu0 0
    %155 = vmatprep.subr.bf16.mxu0 0
    %156 = vmatpush1.bf16.msra.mxu0 0
    %157 = vmatprep.subr.bf16.mxu0 0
    %158 = vmatpush1.bf16.msra.mxu0 0
    %159 = vmatprep.subr.bf16.mxu0 0
    %160 = vmatpush1.bf16.msra.mxu0 0
    %161 = vmatprep.subr.bf16.mxu0 0
    %162 = vmatpush1.bf16.msra.mxu0 0
    %163 = vmatprep.subr.bf16.mxu0 0
    %164 = vmatpush1.bf16.msra.mxu0 %v142
    %165 = vmatprep.subr.bf16.mxu0 0
    %166 = vmatpush1.bf16.msra.mxu0 %v141
    %167 = vmatprep.subr.bf16.mxu0 0
    %168 = vmatpush2.bf16.msra.mxu0 0
    %169 = vmatprep.subr.bf16.mxu0 0
    %170 = vmatpush2.bf16.msra.mxu0 0
    %171 = vmatprep.subr.bf16.mxu0 0
    %172 = vmatpush2.bf16.msra.mxu0 0
    %173 = vmatprep.subr.bf16.mxu0 0
    %174 = vmatpush2.bf16.msra.mxu0 0
    %175 = vmatprep.subr.bf16.mxu0 0
    %176 = vmatpush2.bf16.msra.mxu0 0
    %177 = vmatprep.subr.bf16.mxu0 0
    %178 = vmatpush2.bf16.msra.mxu0 0
    %179 = vmatprep.subr.bf16.mxu0 0
    %180 = vmatpush2.bf16.msra.mxu0 0
    %181 = vmatprep.subr.bf16.mxu0 0
    %182 = vmatpush2.bf16.msra.mxu0 0
    %183 = vmatprep.mubr.bf16.mxu0 0
    %184 = vmatmul.mubr.bf16.gmra.mxu0 %v146
    %v185 = vpop.f32.mrf.mxu0
    %v186 = vadd.f32 0.0, %v185
    %v187 = vpop.f32.mrf.mxu0
    %v188 = vpop.f32.mrf.mxu0
    %v189 = vadd.f32 0.0, %v188
    %v190 = vpop.f32.mrf.mxu0
    %191 = vmatprep.mubr.bf16.mxu0 0
    %192 = vmatmul.mubr.bf16.gmra.mxu0 %v149
    %v193 = vpop.f32.mrf.mxu0
    %v194 = vadd.f32 0.0, %v193
    %v195 = vpop.f32.mrf.mxu0
    %v196 = vpop.f32.mrf.mxu0
    %v197 = vadd.f32 0.0, %v196
    %v198 = vpop.f32.mrf.mxu0
    %199 = vdwg.mxu0
    %v200 = vmul.f32 %v186, %v186
    %v201 = vmul.f32 %v189, %v189
    %v202 = vmul.f32 %v194, %v194
    %v203 = vmul.f32 %v197, %v197
    %v204 = vsel %vm57, %v200, 0.0
    %205 = vadd.xlane.f32.xlu0 %v204
    %v206 = vpop.xlane.xlu0 %205
    %v207 = vsel %vm57, %v201, 0.0
    %208 = vadd.xlane.f32.xlu0 %v207
    %v209 = vpop.xlane.xlu0 %208
    %v210 = vsel %vm57, %v202, 0.0
    %211 = vadd.xlane.f32.xlu0 %v210
    %v212 = vpop.xlane.xlu0 %211
    %v213 = vsel %vm57, %v203, 0.0
    %214 = vadd.xlane.f32.xlu0 %v213
    %v215 = vpop.xlane.xlu0 %214
    %v216 = vrsqrt.pop %v206
    %v217 = vrsqrt.pop %v209
    %v218 = vrsqrt.pop %v212
    %v219 = vrsqrt.pop %v215
    %v220 = vmul.f32 %v186, %v216
    %v221 = vmul.f32 %v189, %v217
    %v222 = vmul.f32 %v194, %v218
    %v223 = vmul.f32 %v197, %v219
    %v224 = vld [vmem:[%s3] sm:$0xf]
    %v225 = vld [vmem:[%s3 + $0x4] sm:$0xf]
    %v226 = vld [vmem:[%s4] sm:$0xf]
    %v227 = vld [vmem:[%s4 + $0x4] sm:$0xf]
    %v228 = vld [vmem:[%s4 + $0x8] sm:$0xf]
    %v229 = vld [vmem:[%s4 + $0xc] sm:$0xf]
    %v232 = vunpack.c.l.b16 %v224
    %v233 = vunpack.c.l.b16 %v225
    %v234 = vpack.c.b16 %v233, %v232
    %v239 = vunpack.c.l.b16 %v226
    %v240 = vunpack.c.l.b16 %v227
    %v241 = vunpack.c.l.b16 %v228
    %v242 = vunpack.c.l.b16 %v229
    %v243 = vpack.c.b16 %v240, %v239
    %v244 = vpack.c.b16 %v242, %v241
    %v248 = vsel %vm57, %v234, 0
    %250 = vmatprep.subr.bf16.mxu0 0
    %251 = vmatpush1.bf16.msra.mxu0 0
    %252 = vmatprep.subr.bf16.mxu0 0
    %253 = vmatpush1.bf16.msra.mxu0 0
    %254 = vmatprep.subr.bf16.mxu0 0
    %255 = vmatpush1.bf16.msra.mxu0 0
    %256 = vmatprep.subr.bf16.mxu0 0
    %257 = vmatpush1.bf16.msra.mxu0 0
    %258 = vmatprep.subr.bf16.mxu0 0
    %259 = vmatpush1.bf16.msra.mxu0 0
    %260 = vmatprep.subr.bf16.mxu0 0
    %261 = vmatpush1.bf16.msra.mxu0 0
    %262 = vmatprep.subr.bf16.mxu0 0
    %263 = vmatpush1.bf16.msra.mxu0 %v244
    %264 = vmatprep.subr.bf16.mxu0 0
    %265 = vmatpush1.bf16.msra.mxu0 %v243
    %266 = vmatprep.subr.bf16.mxu0 0
    %267 = vmatpush2.bf16.msra.mxu0 0
    %268 = vmatprep.subr.bf16.mxu0 0
    %269 = vmatpush2.bf16.msra.mxu0 0
    %270 = vmatprep.subr.bf16.mxu0 0
    %271 = vmatpush2.bf16.msra.mxu0 0
    %272 = vmatprep.subr.bf16.mxu0 0
    %273 = vmatpush2.bf16.msra.mxu0 0
    %274 = vmatprep.subr.bf16.mxu0 0
    %275 = vmatpush2.bf16.msra.mxu0 0
    %276 = vmatprep.subr.bf16.mxu0 0
    %277 = vmatpush2.bf16.msra.mxu0 0
    %278 = vmatprep.subr.bf16.mxu0 0
    %279 = vmatpush2.bf16.msra.mxu0 0
    %280 = vmatprep.subr.bf16.mxu0 0
    %281 = vmatpush2.bf16.msra.mxu0 0
    %282 = vmatprep.mubr.bf16.mxu0 0
    %283 = vmatmul.mubr.bf16.gmra.mxu0 %v248
    %v284 = vpop.f32.mrf.mxu0
    %v285 = vadd.f32 0.0, %v284
    %v286 = vpop.f32.mrf.mxu0
    %v287 = vpop.f32.mrf.mxu0
    %v288 = vadd.f32 0.0, %v287
    %v289 = vpop.f32.mrf.mxu0
    %290 = vdwg.mxu0
    %v291 = vld [vmem:[%s9] sm:$0xf]
    %v292 = vpack.c.bf16 %v288, %v285
    %vm293 = vcmask 130048
    %v295 = vsel %vm293, %v291, 0
    %297 = vmatprep.subr.bf16.mxu0 0
    %298 = vmatpush1.bf16.msra.mxu0 0
    %299 = vmatprep.subr.bf16.mxu0 0
    %300 = vmatpush1.bf16.msra.mxu0 0
    %301 = vmatprep.subr.bf16.mxu0 0
    %302 = vmatpush1.bf16.msra.mxu0 0
    %303 = vmatprep.subr.bf16.mxu0 0
    %304 = vmatpush1.bf16.msra.mxu0 0
    %305 = vmatprep.subr.bf16.mxu0 0
    %306 = vmatpush1.bf16.msra.mxu0 0
    %307 = vmatprep.subr.bf16.mxu0 0
    %308 = vmatpush1.bf16.msra.mxu0 0
    %309 = vmatprep.subr.bf16.mxu0 0
    %310 = vmatpush1.bf16.msra.mxu0 0
    %311 = vmatprep.subr.bf16.mxu0 0
    %312 = vmatpush1.bf16.msra.mxu0 %v292
    %313 = vmatprep.subr.bf16.mxu0 0
    %314 = vmatpush2.bf16.msra.mxu0 0
    %315 = vmatprep.subr.bf16.mxu0 0
    %316 = vmatpush2.bf16.msra.mxu0 0
    %317 = vmatprep.subr.bf16.mxu0 0
    %318 = vmatpush2.bf16.msra.mxu0 0
    %319 = vmatprep.subr.bf16.mxu0 0
    %320 = vmatpush2.bf16.msra.mxu0 0
    %321 = vmatprep.subr.bf16.mxu0 0
    %322 = vmatpush2.bf16.msra.mxu0 0
    %323 = vmatprep.subr.bf16.mxu0 0
    %324 = vmatpush2.bf16.msra.mxu0 0
    %325 = vmatprep.subr.bf16.mxu0 0
    %326 = vmatpush2.bf16.msra.mxu0 0
    %327 = vmatprep.subr.bf16.mxu0 0
    %328 = vmatpush2.bf16.msra.mxu0 0
    %329 = vmatprep.mubr.bf16.mxu0 0
    %330 = vmatmul.mubr.bf16.gmra.mxu0 %v295
    %v331 = vpop.f32.mrf.mxu0
    %v332 = vadd.f32 0.0, %v331
    %v333 = vpop.f32.mrf.mxu0
    %v334 = vpop.f32.mrf.mxu0
    %v335 = vpop.f32.mrf.mxu0
    %336 = vdwg.mxu0
    %v337 = vpack.c.bf16 %v332, %v332
    %v338 = vld [vmem:[%s7] sm:$0xf]
    %v339 = vld [vmem:[%s7 + $0x4] sm:$0xf]
    %v340 = vld [vmem:[%s7 + $0x8] sm:$0xf]
    %v341 = vld [vmem:[%s7 + $0xc] sm:$0xf]
    %v342 = vld [vmem:[%s7 + $0x10] sm:$0xf]
    %v343 = vld [vmem:[%s7 + $0x14] sm:$0xf]
    %v350 = vunpack.c.l.b16 %v338
    %v351 = vunpack.c.l.b16 %v339
    %v352 = vunpack.c.l.b16 %v340
    %v353 = vunpack.c.l.b16 %v341
    %v354 = vunpack.c.l.b16 %v342
    %v355 = vunpack.c.l.b16 %v343
    %v356 = vpack.c.b16 %v351, %v350
    %v357 = vpack.c.b16 %v353, %v352
    %v358 = vpack.c.b16 %v355, %v354
    %vm362 = vcmask 392192
    %v364 = vsel %vm362, %v337, 0
    %366 = vmatprep.subr.bf16.mxu0 0
    %367 = vmatpush1.bf16.msra.mxu0 0
    %368 = vmatprep.subr.bf16.mxu0 0
    %369 = vmatpush1.bf16.msra.mxu0 0
    %370 = vmatprep.subr.bf16.mxu0 0
    %371 = vmatpush1.bf16.msra.mxu0 0
    %372 = vmatprep.subr.bf16.mxu0 0
    %373 = vmatpush1.bf16.msra.mxu0 0
    %374 = vmatprep.subr.bf16.mxu0 0
    %375 = vmatpush1.bf16.msra.mxu0 0
    %376 = vmatprep.subr.bf16.mxu0 0
    %377 = vmatpush1.bf16.msra.mxu0 %v358
    %378 = vmatprep.subr.bf16.mxu0 0
    %379 = vmatpush1.bf16.msra.mxu0 %v357
    %380 = vmatprep.subr.bf16.mxu0 0
    %381 = vmatpush1.bf16.msra.mxu0 %v356
    %382 = vmatprep.subr.bf16.mxu0 0
    %383 = vmatpush2.bf16.msra.mxu0 0
    %384 = vmatprep.subr.bf16.mxu0 0
    %385 = vmatpush2.bf16.msra.mxu0 0
    %386 = vmatprep.subr.bf16.mxu0 0
    %387 = vmatpush2.bf16.msra.mxu0 0
    %388 = vmatprep.subr.bf16.mxu0 0
    %389 = vmatpush2.bf16.msra.mxu0 0
    %390 = vmatprep.subr.bf16.mxu0 0
    %391 = vmatpush2.bf16.msra.mxu0 0
    %392 = vmatprep.subr.bf16.mxu0 0
    %393 = vmatpush2.bf16.msra.mxu0 0
    %394 = vmatprep.subr.bf16.mxu0 0
    %395 = vmatpush2.bf16.msra.mxu0 0
    %396 = vmatprep.subr.bf16.mxu0 0
    %397 = vmatpush2.bf16.msra.mxu0 0
    %398 = vmatprep.mubr.bf16.mxu0 0
    %399 = vmatmul.mubr.bf16.gmra.mxu0 %v364
    %v400 = vpop.f32.mrf.mxu0
    %v401 = vadd.f32 0.0, %v400
    %v402 = vpop.f32.mrf.mxu0
    %v403 = vpop.f32.mrf.mxu0
    %v404 = vpop.f32.mrf.mxu0
    %405 = vdwg.mxu0
    %v406 = vld [vmem:[%s5] sm:$0x3f]
    %v407 = vld [vmem:[%s6] sm:$0xf]
    %v408 = vld [vmem:[%s6 + $0x4] sm:$0xf]
    %v409 = vld [vmem:[%s6 + $0x8] sm:$0xf]
    %v410 = vld [vmem:[%s6 + $0xc] sm:$0xf]
    %v411 = vld [vmem:[%s6 + $0x10] sm:$0xf]
    %v412 = vld [vmem:[%s6 + $0x14] sm:$0xf]
    %v413 = vld [vmem:[%s6 + $0x18] sm:$0xf]
    %v414 = vld [vmem:[%s6 + $0x1c] sm:$0xf]
    %v415 = vld [vmem:[%s6 + $0x20] sm:$0xf]
    %v416 = vld [vmem:[%s6 + $0x24] sm:$0xf]
    %v417 = vld [vmem:[%s6 + $0x28] sm:$0xf]
    %v418 = vld [vmem:[%s6 + $0x2c] sm:$0xf]
    %v419 = vld [vmem:[%s6 + $0x30] sm:$0xf]
    %v420 = vld [vmem:[%s6 + $0x34] sm:$0xf]
    %v421 = vld [vmem:[%s6 + $0x38] sm:$0xf]
    %v422 = vld [vmem:[%s6 + $0x3c] sm:$0xf]
    %v423 = vld [vmem:[%s6 + $0x40] sm:$0xf]
    %v424 = vld [vmem:[%s6 + $0x44] sm:$0xf]
    %v425 = vld [vmem:[%s6 + $0x48] sm:$0xf]
    %v426 = vld [vmem:[%s6 + $0x4c] sm:$0xf]
    %v427 = vld [vmem:[%s6 + $0x50] sm:$0xf]
    %v428 = vld [vmem:[%s6 + $0x54] sm:$0xf]
    %v429 = vld [vmem:[%s6 + $0x58] sm:$0xf]
    %v430 = vld [vmem:[%s6 + $0x5c] sm:$0xf]
    %v431 = vld [vmem:[%s6 + $0x60] sm:$0xf]
    %v432 = vld [vmem:[%s6 + $0x64] sm:$0xf]
    %v433 = vld [vmem:[%s6 + $0x68] sm:$0xf]
    %v434 = vld [vmem:[%s6 + $0x6c] sm:$0xf]
    %v435 = vld [vmem:[%s6 + $0x70] sm:$0xf]
    %v436 = vld [vmem:[%s6 + $0x74] sm:$0xf]
    %v437 = vld [vmem:[%s6 + $0x78] sm:$0xf]
    %v438 = vld [vmem:[%s6 + $0x7c] sm:$0xf]
    %v439 = vld [vmem:[%s6 + $0x80] sm:$0xf]
    %v440 = vld [vmem:[%s6 + $0x84] sm:$0xf]
    %v441 = vld [vmem:[%s6 + $0x88] sm:$0xf]
    %v442 = vld [vmem:[%s6 + $0x8c] sm:$0xf]
    %v443 = vld [vmem:[%s6 + $0x90] sm:$0xf]
    %v444 = vld [vmem:[%s6 + $0x94] sm:$0xf]
    %v445 = vld [vmem:[%s6 + $0x98] sm:$0xf]
    %v446 = vld [vmem:[%s6 + $0x9c] sm:$0xf]
    %v447 = vld [vmem:[%s6 + $0xa0] sm:$0xf]
    %v448 = vld [vmem:[%s6 + $0xa4] sm:$0xf]
    %v449 = vld [vmem:[%s6 + $0xa8] sm:$0xf]
    %v450 = vld [vmem:[%s6 + $0xac] sm:$0xf]
    %v451 = vld [vmem:[%s6 + $0xb0] sm:$0xf]
    %v452 = vld [vmem:[%s6 + $0xb4] sm:$0xf]
    %v453 = vld [vmem:[%s6 + $0xb8] sm:$0xf]
    %v454 = vld [vmem:[%s6 + $0xbc] sm:$0xf]
    %v455 = vld [vmem:[%s6 + $0xc0] sm:$0xf]
    %v456 = vld [vmem:[%s6 + $0xc4] sm:$0xf]
    %v457 = vld [vmem:[%s6 + $0xc8] sm:$0xf]
    %v458 = vld [vmem:[%s6 + $0xcc] sm:$0xf]
    %v459 = vld [vmem:[%s6 + $0xd0] sm:$0xf]
    %v460 = vld [vmem:[%s6 + $0xd4] sm:$0xf]
    %v461 = vld [vmem:[%s6 + $0xd8] sm:$0xf]
    %v462 = vld [vmem:[%s6 + $0xdc] sm:$0xf]
    %v463 = vld [vmem:[%s6 + $0xe0] sm:$0xf]
    %v464 = vld [vmem:[%s6 + $0xe4] sm:$0xf]
    %v465 = vld [vmem:[%s6 + $0xe8] sm:$0xf]
    %v466 = vld [vmem:[%s6 + $0xec] sm:$0xf]
    %v467 = vld [vmem:[%s6 + $0xf0] sm:$0xf]
    %v468 = vld [vmem:[%s6 + $0xf4] sm:$0xf]
    %v469 = vld [vmem:[%s6 + $0xf8] sm:$0xf]
    %v470 = vld [vmem:[%s6 + $0xfc] sm:$0xf]
    %v471 = vld [vmem:[%s6 + $0x100] sm:$0xf]
    %v472 = vld [vmem:[%s6 + $0x104] sm:$0xf]
    %v473 = vld [vmem:[%s6 + $0x108] sm:$0xf]
    %v474 = vld [vmem:[%s6 + $0x10c] sm:$0xf]
    %v475 = vld [vmem:[%s6 + $0x110] sm:$0xf]
    %v476 = vld [vmem:[%s6 + $0x114] sm:$0xf]
    %v477 = vld [vmem:[%s6 + $0x118] sm:$0xf]
    %v478 = vld [vmem:[%s6 + $0x11c] sm:$0xf]
    %v479 = vld [vmem:[%s6 + $0x120] sm:$0xf]
    %v480 = vld [vmem:[%s6 + $0x124] sm:$0xf]
    %v481 = vld [vmem:[%s6 + $0x128] sm:$0xf]
    %v482 = vld [vmem:[%s6 + $0x12c] sm:$0xf]
    %v483 = vld [vmem:[%s6 + $0x130] sm:$0xf]
    %v484 = vld [vmem:[%s6 + $0x134] sm:$0xf]
    %v485 = vld [vmem:[%s6 + $0x138] sm:$0xf]
    %v486 = vld [vmem:[%s6 + $0x13c] sm:$0xf]
    %v487 = vld [vmem:[%s6 + $0x140] sm:$0xf]
    %v488 = vld [vmem:[%s6 + $0x144] sm:$0xf]
    %v489 = vld [vmem:[%s6 + $0x148] sm:$0xf]
    %v490 = vld [vmem:[%s6 + $0x14c] sm:$0xf]
    %v491 = vld [vmem:[%s6 + $0x150] sm:$0xf]
    %v492 = vld [vmem:[%s6 + $0x154] sm:$0xf]
    %v493 = vld [vmem:[%s6 + $0x158] sm:$0xf]
    %v494 = vld [vmem:[%s6 + $0x15c] sm:$0xf]
    %v495 = vld [vmem:[%s6 + $0x160] sm:$0xf]
    %v496 = vld [vmem:[%s6 + $0x164] sm:$0xf]
    %v497 = vld [vmem:[%s6 + $0x168] sm:$0xf]
    %v498 = vld [vmem:[%s6 + $0x16c] sm:$0xf]
    %v499 = vld [vmem:[%s6 + $0x170] sm:$0xf]
    %v500 = vld [vmem:[%s6 + $0x174] sm:$0xf]
    %v501 = vld [vmem:[%s6 + $0x178] sm:$0xf]
    %v502 = vld [vmem:[%s6 + $0x17c] sm:$0xf]
    %v504 = vcombine.high %v406, %v406
    %v506 = vunpack.c.l.s4 1966171168
    %v507 = vunpack.c.0.s8 %v506
    %v508 = vlaneseq
    %v509 = vshrl.u32 %v508, 7
    %v510 = vsub.s32 %v507, %v509
    %v511 = vrot.slane %v406, %v510
    %v513 = vunpack.c.l.s4 1966171168
    %v514 = vunpack.c.0.s8 %v513
    %v515 = vlaneseq
    %v516 = vshrl.u32 %v515, 7
    %v517 = vsub.s32 %v514, %v516
    %v518 = vrot.slane %v504, %v517
    %v519 = vcombine.high %v511, %v511
    %v520 = vcombine.high %v518, %v518
    %v522 = vunpack.c.l.s4 1966171168
    %v523 = vunpack.c.0.s8 %v522
    %v524 = vlaneseq
    %v525 = vshrl.u32 %v524, 7
    %v526 = vsub.s32 %v523, %v525
    %v527 = vrot.slane %v511, %v526
    %v529 = vunpack.c.l.s4 1966171168
    %v530 = vunpack.c.0.s8 %v529
    %v531 = vlaneseq
    %v532 = vshrl.u32 %v531, 7
    %v533 = vsub.s32 %v530, %v532
    %v534 = vrot.slane %v518, %v533
    %v536 = vunpack.c.l.s4 1966171168
    %v537 = vunpack.c.0.s8 %v536
    %v538 = vlaneseq
    %v539 = vshrl.u32 %v538, 7
    %v540 = vsub.s32 %v537, %v539
    %v541 = vrot.slane %v519, %v540
    %v543 = vunpack.c.l.s4 1966171168
    %v544 = vunpack.c.0.s8 %v543
    %v545 = vlaneseq
    %v546 = vshrl.u32 %v545, 7
    %v547 = vsub.s32 %v544, %v546
    %v548 = vrot.slane %v520, %v547
    %v549 = vcombine.high %v527, %v527
    %v550 = vcombine.high %v541, %v541
    %v653 = vunpack.c.l.b16 %v407
    %v654 = vunpack.c.l.b16 %v408
    %v655 = vunpack.c.l.b16 %v409
    %v656 = vunpack.c.l.b16 %v410
    %v657 = vunpack.c.l.b16 %v411
    %v658 = vunpack.c.l.b16 %v412
    %v659 = vunpack.c.l.b16 %v413
    %v660 = vunpack.c.l.b16 %v414
    %v661 = vunpack.c.l.b16 %v415
    %v662 = vunpack.c.l.b16 %v416
    %v663 = vunpack.c.l.b16 %v417
    %v664 = vunpack.c.l.b16 %v418
    %v665 = vunpack.c.l.b16 %v419
    %v666 = vunpack.c.l.b16 %v420
    %v667 = vunpack.c.l.b16 %v421
    %v668 = vunpack.c.l.b16 %v422
    %v669 = vunpack.c.l.b16 %v423
    %v670 = vunpack.c.l.b16 %v424
    %v671 = vunpack.c.l.b16 %v425
    %v672 = vunpack.c.l.b16 %v426
    %v673 = vunpack.c.l.b16 %v427
    %v674 = vunpack.c.l.b16 %v428
    %v675 = vunpack.c.l.b16 %v429
    %v676 = vunpack.c.l.b16 %v430
    %v677 = vunpack.c.l.b16 %v431
    %v678 = vunpack.c.l.b16 %v432
    %v679 = vunpack.c.l.b16 %v433
    %v680 = vunpack.c.l.b16 %v434
    %v681 = vunpack.c.l.b16 %v435
    %v682 = vunpack.c.l.b16 %v436
    %v683 = vunpack.c.l.b16 %v437
    %v684 = vunpack.c.l.b16 %v438
    %v685 = vunpack.c.l.b16 %v439
    %v686 = vunpack.c.l.b16 %v440
    %v687 = vunpack.c.l.b16 %v441
    %v688 = vunpack.c.l.b16 %v442
    %v689 = vunpack.c.l.b16 %v443
    %v690 = vunpack.c.l.b16 %v444
    %v691 = vunpack.c.l.b16 %v445
    %v692 = vunpack.c.l.b16 %v446
    %v693 = vunpack.c.l.b16 %v447
    %v694 = vunpack.c.l.b16 %v448
    %v695 = vunpack.c.l.b16 %v449
    %v696 = vunpack.c.l.b16 %v450
    %v697 = vunpack.c.l.b16 %v451
    %v698 = vunpack.c.l.b16 %v452
    %v699 = vunpack.c.l.b16 %v453
    %v700 = vunpack.c.l.b16 %v454
    %v701 = vunpack.c.l.b16 %v455
    %v702 = vunpack.c.l.b16 %v456
    %v703 = vunpack.c.l.b16 %v457
    %v704 = vunpack.c.l.b16 %v458
    %v705 = vunpack.c.l.b16 %v459
    %v706 = vunpack.c.l.b16 %v460
    %v707 = vunpack.c.l.b16 %v461
    %v708 = vunpack.c.l.b16 %v462
    %v709 = vunpack.c.l.b16 %v463
    %v710 = vunpack.c.l.b16 %v464
    %v711 = vunpack.c.l.b16 %v465
    %v712 = vunpack.c.l.b16 %v466
    %v713 = vunpack.c.l.b16 %v467
    %v714 = vunpack.c.l.b16 %v468
    %v715 = vunpack.c.l.b16 %v469
    %v716 = vunpack.c.l.b16 %v470
    %v717 = vunpack.c.l.b16 %v471
    %v718 = vunpack.c.l.b16 %v472
    %v719 = vunpack.c.l.b16 %v473
    %v720 = vunpack.c.l.b16 %v474
    %v721 = vunpack.c.l.b16 %v475
    %v722 = vunpack.c.l.b16 %v476
    %v723 = vunpack.c.l.b16 %v477
    %v724 = vunpack.c.l.b16 %v478
    %v725 = vunpack.c.l.b16 %v479
    %v726 = vunpack.c.l.b16 %v480
    %v727 = vunpack.c.l.b16 %v481
    %v728 = vunpack.c.l.b16 %v482
    %v729 = vunpack.c.l.b16 %v483
    %v730 = vunpack.c.l.b16 %v484
    %v731 = vunpack.c.l.b16 %v485
    %v732 = vunpack.c.l.b16 %v486
    %v733 = vunpack.c.l.b16 %v487
    %v734 = vunpack.c.l.b16 %v488
    %v735 = vunpack.c.l.b16 %v489
    %v736 = vunpack.c.l.b16 %v490
    %v737 = vunpack.c.l.b16 %v491
    %v738 = vunpack.c.l.b16 %v492
    %v739 = vunpack.c.l.b16 %v493
    %v740 = vunpack.c.l.b16 %v494
    %v741 = vunpack.c.l.b16 %v495
    %v742 = vunpack.c.l.b16 %v496
    %v743 = vunpack.c.l.b16 %v497
    %v744 = vunpack.c.l.b16 %v498
    %v745 = vunpack.c.l.b16 %v499
    %v746 = vunpack.c.l.b16 %v500
    %v747 = vunpack.c.l.b16 %v501
    %v748 = vunpack.c.l.b16 %v502
    %v749 = vpack.c.b16 %v654, %v653
    %v750 = vpack.c.b16 %v656, %v655
    %v751 = vpack.c.b16 %v658, %v657
    %v752 = vpack.c.b16 %v660, %v659
    %v753 = vpack.c.b16 %v662, %v661
    %v754 = vpack.c.b16 %v664, %v663
    %v755 = vpack.c.b16 %v666, %v665
    %v756 = vpack.c.b16 %v668, %v667
    %v757 = vpack.c.b16 %v670, %v669
    %v758 = vpack.c.b16 %v672, %v671
    %v759 = vpack.c.b16 %v674, %v673
    %v760 = vpack.c.b16 %v676, %v675
    %v761 = vpack.c.b16 %v678, %v677
    %v762 = vpack.c.b16 %v680, %v679
    %v763 = vpack.c.b16 %v682, %v681
    %v764 = vpack.c.b16 %v684, %v683
    %v765 = vpack.c.b16 %v686, %v685
    %v766 = vpack.c.b16 %v688, %v687
    %v767 = vpack.c.b16 %v690, %v689
    %v768 = vpack.c.b16 %v692, %v691
    %v769 = vpack.c.b16 %v694, %v693
    %v770 = vpack.c.b16 %v696, %v695
    %v771 = vpack.c.b16 %v698, %v697
    %v772 = vpack.c.b16 %v700, %v699
    %v773 = vpack.c.b16 %v702, %v701
    %v774 = vpack.c.b16 %v704, %v703
    %v775 = vpack.c.b16 %v706, %v705
    %v776 = vpack.c.b16 %v708, %v707
    %v777 = vpack.c.b16 %v710, %v709
    %v778 = vpack.c.b16 %v712, %v711
    %v779 = vpack.c.b16 %v714, %v713
    %v780 = vpack.c.b16 %v716, %v715
    %v781 = vpack.c.b16 %v718, %v717
    %v782 = vpack.c.b16 %v720, %v719
    %v783 = vpack.c.b16 %v722, %v721
    %v784 = vpack.c.b16 %v724, %v723
    %v785 = vpack.c.b16 %v726, %v725
    %v786 = vpack.c.b16 %v728, %v727
    %v787 = vpack.c.b16 %v730, %v729
    %v788 = vpack.c.b16 %v732, %v731
    %v789 = vpack.c.b16 %v734, %v733
    %v790 = vpack.c.b16 %v736, %v735
    %v791 = vpack.c.b16 %v738, %v737
    %v792 = vpack.c.b16 %v740, %v739
    %v793 = vpack.c.b16 %v742, %v741
    %v794 = vpack.c.b16 %v744, %v743
    %v795 = vpack.c.b16 %v746, %v745
    %v796 = vpack.c.b16 %v748, %v747
    %845 = vmatprep.subr.bf16.mxu0 0
    %846 = vmatpush1.bf16.msra.mxu0 %v756
    %847 = vmatprep.subr.bf16.mxu0 0
    %848 = vmatpush1.bf16.msra.mxu0 %v755
    %849 = vmatprep.subr.bf16.mxu0 0
    %850 = vmatpush1.bf16.msra.mxu0 %v754
    %851 = vmatprep.subr.bf16.mxu0 0
    %852 = vmatpush1.bf16.msra.mxu0 %v753
    %853 = vmatprep.subr.bf16.mxu0 0
    %854 = vmatpush1.bf16.msra.mxu0 %v752
    %855 = vmatprep.subr.bf16.mxu0 0
    %856 = vmatpush1.bf16.msra.mxu0 %v751
    %857 = vmatprep.subr.bf16.mxu0 0
    %858 = vmatpush1.bf16.msra.mxu0 %v750
    %859 = vmatprep.subr.bf16.mxu0 0
    %860 = vmatpush1.bf16.msra.mxu0 %v749
    %861 = vmatprep.subr.bf16.mxu0 0
    %862 = vmatpush2.bf16.msra.mxu0 %v764
    %863 = vmatprep.subr.bf16.mxu0 0
    %864 = vmatpush2.bf16.msra.mxu0 %v763
    %865 = vmatprep.subr.bf16.mxu0 0
    %866 = vmatpush2.bf16.msra.mxu0 %v762
    %867 = vmatprep.subr.bf16.mxu0 0
    %868 = vmatpush2.bf16.msra.mxu0 %v761
    %869 = vmatprep.subr.bf16.mxu0 0
    %870 = vmatpush2.bf16.msra.mxu0 %v760
    %871 = vmatprep.subr.bf16.mxu0 0
    %872 = vmatpush2.bf16.msra.mxu0 %v759
    %873 = vmatprep.subr.bf16.mxu0 0
    %874 = vmatpush2.bf16.msra.mxu0 %v758
    %875 = vmatprep.subr.bf16.mxu0 0
    %876 = vmatpush2.bf16.msra.mxu0 %v757
    %877 = vmatprep.mubr.bf16.mxu0 %v541
    %878 = vmatmul.mubr.bf16.gmra.mxu0 %v527
    %v879 = vpop.f32.mrf.mxu0
    %v880 = vadd.f32 0.0, %v879
    %v881 = vpop.f32.mrf.mxu0
    %v882 = vpop.f32.mrf.mxu0
    %v883 = vpop.f32.mrf.mxu0
    %884 = vdwg.mxu0
    %885 = vmatprep.subr.bf16.mxu0 0
    %886 = vmatpush1.bf16.msra.mxu0 %v772
    %887 = vmatprep.subr.bf16.mxu0 0
    %888 = vmatpush1.bf16.msra.mxu0 %v771
    %889 = vmatprep.subr.bf16.mxu0 0
    %890 = vmatpush1.bf16.msra.mxu0 %v770
    %891 = vmatprep.subr.bf16.mxu0 0
    %892 = vmatpush1.bf16.msra.mxu0 %v769
    %893 = vmatprep.subr.bf16.mxu0 0
    %894 = vmatpush1.bf16.msra.mxu0 %v768
    %895 = vmatprep.subr.bf16.mxu0 0
    %896 = vmatpush1.bf16.msra.mxu0 %v767
    %897 = vmatprep.subr.bf16.mxu0 0
    %898 = vmatpush1.bf16.msra.mxu0 %v766
    %899 = vmatprep.subr.bf16.mxu0 0
    %900 = vmatpush1.bf16.msra.mxu0 %v765
    %901 = vmatprep.subr.bf16.mxu0 0
    %902 = vmatpush2.bf16.msra.mxu0 %v780
    %903 = vmatprep.subr.bf16.mxu0 0
    %904 = vmatpush2.bf16.msra.mxu0 %v779
    %905 = vmatprep.subr.bf16.mxu0 0
    %906 = vmatpush2.bf16.msra.mxu0 %v778
    %907 = vmatprep.subr.bf16.mxu0 0
    %908 = vmatpush2.bf16.msra.mxu0 %v777
    %909 = vmatprep.subr.bf16.mxu0 0
    %910 = vmatpush2.bf16.msra.mxu0 %v776
    %911 = vmatprep.subr.bf16.mxu0 0
    %912 = vmatpush2.bf16.msra.mxu0 %v775
    %913 = vmatprep.subr.bf16.mxu0 0
    %914 = vmatpush2.bf16.msra.mxu0 %v774
    %915 = vmatprep.subr.bf16.mxu0 0
    %916 = vmatpush2.bf16.msra.mxu0 %v773
    %917 = vmatprep.mubr.bf16.mxu0 %v550
    %918 = vmatmul.mubr.bf16.gmra.mxu0 %v549
    %v919 = vpop.f32.mrf.mxu0
    %v920 = vadd.f32 %v880, %v919
    %v921 = vpop.f32.mrf.mxu0
    %v922 = vpop.f32.mrf.mxu0
    %v923 = vpop.f32.mrf.mxu0
    %924 = vdwg.mxu0
    %925 = vmatprep.subr.bf16.mxu0 0
    %926 = vmatpush1.bf16.msra.mxu0 %v788
    %927 = vmatprep.subr.bf16.mxu0 0
    %928 = vmatpush1.bf16.msra.mxu0 %v787
    %929 = vmatprep.subr.bf16.mxu0 0
    %930 = vmatpush1.bf16.msra.mxu0 %v786
    %931 = vmatprep.subr.bf16.mxu0 0
    %932 = vmatpush1.bf16.msra.mxu0 %v785
    %933 = vmatprep.subr.bf16.mxu0 0
    %934 = vmatpush1.bf16.msra.mxu0 %v784
    %935 = vmatprep.subr.bf16.mxu0 0
    %936 = vmatpush1.bf16.msra.mxu0 %v783
    %937 = vmatprep.subr.bf16.mxu0 0
    %938 = vmatpush1.bf16.msra.mxu0 %v782
    %939 = vmatprep.subr.bf16.mxu0 0
    %940 = vmatpush1.bf16.msra.mxu0 %v781
    %941 = vmatprep.subr.bf16.mxu0 0
    %942 = vmatpush2.bf16.msra.mxu0 %v796
    %943 = vmatprep.subr.bf16.mxu0 0
    %944 = vmatpush2.bf16.msra.mxu0 %v795
    %945 = vmatprep.subr.bf16.mxu0 0
    %946 = vmatpush2.bf16.msra.mxu0 %v794
    %947 = vmatprep.subr.bf16.mxu0 0
    %948 = vmatpush2.bf16.msra.mxu0 %v793
    %949 = vmatprep.subr.bf16.mxu0 0
    %950 = vmatpush2.bf16.msra.mxu0 %v792
    %951 = vmatprep.subr.bf16.mxu0 0
    %952 = vmatpush2.bf16.msra.mxu0 %v791
    %953 = vmatprep.subr.bf16.mxu0 0
    %954 = vmatpush2.bf16.msra.mxu0 %v790
    %955 = vmatprep.subr.bf16.mxu0 0
    %956 = vmatpush2.bf16.msra.mxu0 %v789
    %957 = vmatprep.mubr.bf16.mxu0 %v548
    %958 = vmatmul.mubr.bf16.gmra.mxu0 %v534
    %v959 = vpop.f32.mrf.mxu0
    %v960 = vadd.f32 %v920, %v959
    %v961 = vpop.f32.mrf.mxu0
    %v962 = vpop.f32.mrf.mxu0
    %v963 = vpop.f32.mrf.mxu0
    %964 = vdwg.mxu0
    %v965 = vld [vmem:[%s10] sm:$0xff]
    %vm966 = vcmask 15360
    %v968 = vsel %vm966, %v965, 0
    %vm970 = vcmask 1041408
    %v972 = vsel %vm970, %v960, 0
    %974 = vmatprep.subr.mxu0 0.0
    %975 = vmatpush1.msra.mxu0 0.0
    %976 = vmatprep.subr.mxu0 0.0
    %977 = vmatpush1.msra.mxu0 0.0
    %978 = vmatprep.subr.mxu0 0.0
    %979 = vmatpush1.msra.mxu0 0.0
    %980 = vmatprep.subr.mxu0 0.0
    %981 = vmatpush1.msra.mxu0 0.0
    %982 = vmatprep.subr.mxu0 0.0
    %983 = vmatpush1.msra.mxu0 0.0
    %984 = vmatprep.subr.mxu0 0.0
    %985 = vmatpush1.msra.mxu0 0.0
    %986 = vmatprep.subr.mxu0 0.0
    %987 = vmatpush1.msra.mxu0 0.0
    %988 = vmatprep.subr.mxu0 0.0
    %989 = vmatpush1.msra.mxu0 0.0
    %990 = vmatprep.subr.mxu0 0.0
    %991 = vmatpush1.msra.mxu0 0.0
    %992 = vmatprep.subr.mxu0 0.0
    %993 = vmatpush1.msra.mxu0 0.0
    %994 = vmatprep.subr.mxu0 0.0
    %995 = vmatpush1.msra.mxu0 0.0
    %996 = vmatprep.subr.mxu0 0.0
    %997 = vmatpush1.msra.mxu0 0.0
    %998 = vmatprep.subr.mxu0 0.0
    %999 = vmatpush1.msra.mxu0 0.0
    %1000 = vmatprep.subr.mxu0 0.0
    %1001 = vmatpush1.msra.mxu0 0.0
    %1002 = vmatprep.subr.mxu0 0.0
    %1003 = vmatpush1.msra.mxu0 0.0
    %1004 = vmatprep.subr.mxu0 0.0
    %1005 = vmatpush1.msra.mxu0 %v972
    %1006 = vmatprep.subr.mxu0 0.0
    %1007 = vmatpush2.msra.mxu0 0.0
    %1008 = vmatprep.subr.mxu0 0.0
    %1009 = vmatpush2.msra.mxu0 0.0
    %1010 = vmatprep.subr.mxu0 0.0
    %1011 = vmatpush2.msra.mxu0 0.0
    %1012 = vmatprep.subr.mxu0 0.0
    %1013 = vmatpush2.msra.mxu0 0.0
    %1014 = vmatprep.subr.mxu0 0.0
    %1015 = vmatpush2.msra.mxu0 0.0
    %1016 = vmatprep.subr.mxu0 0.0
    %1017 = vmatpush2.msra.mxu0 0.0
    %1018 = vmatprep.subr.mxu0 0.0
    %1019 = vmatpush2.msra.mxu0 0.0
    %1020 = vmatprep.subr.mxu0 0.0
    %1021 = vmatpush2.msra.mxu0 0.0
    %1022 = vmatprep.subr.mxu0 0.0
    %1023 = vmatpush2.msra.mxu0 0.0
    %1024 = vmatprep.subr.mxu0 0.0
    %1025 = vmatpush2.msra.mxu0 0.0
    %1026 = vmatprep.subr.mxu0 0.0
    %1027 = vmatpush2.msra.mxu0 0.0
    %1028 = vmatprep.subr.mxu0 0.0
    %1029 = vmatpush2.msra.mxu0 0.0
    %1030 = vmatprep.subr.mxu0 0.0
    %1031 = vmatpush2.msra.mxu0 0.0
    %1032 = vmatprep.subr.mxu0 0.0
    %1033 = vmatpush2.msra.mxu0 0.0
    %1034 = vmatprep.subr.mxu0 0.0
    %1035 = vmatpush2.msra.mxu0 0.0
    %1036 = vmatprep.subr.mxu0 0.0
    %1037 = vmatpush2.msra.mxu0 0.0
    %1038 = vmatprep.mubr.f32.mxu0 0.0
    %1039 = vmatmul.mubr.f32.gmra.mxu0 %v968
    %v1040 = vpop.f32.mrf.mxu0
    %v1041 = vadd.f32 %v401, %v1040
    %v1042 = vpop.f32.mrf.mxu0
    %1043 = vdwg.mxu0
    %v1044 = vld [vmem:[%s8] sm:$0x1]
    %v1046 = vlaneseq
    %v1047 = vshrl.u32 %v1046, 7
    %v1048 = vsub.s32 0, %v1047
    %v1049 = vrot.slane %v1044, %v1048
    %v1051 = vadd.f32 %v1041, %v1049
    %v1052 = vmul.f32 %v1051, %v1051
    %v1053 = vsel %vm57, %v1052, 0.0
    %1054 = vadd.xlane.f32.xlu0 %v1053
    %v1055 = vpop.xlane.xlu0 %1054
    %v1056 = vrsqrt.pop %v1055
    %v1057 = vmul.f32 %v1051, %v1056
    %v1058 = vpack.c.bf16 %v1057, %v1057
    %v1059 = vpack.c.bf16 %v221, %v220
    %v1060 = vpack.c.bf16 %v223, %v222
    %v1062 = vsel %vm57, %v1058, 0
    %v1065 = vsel %vm57, %v1059, 0
    %v1068 = vsel %vm57, %v1060, 0
    %1070 = vmatprep.subr.bf16.mxu0 0
    %1071 = vmatpush1.bf16.xpose.msra.mxu0 0
    %1072 = vmatprep.subr.bf16.mxu0 0
    %1073 = vmatpush1.bf16.xpose.msra.mxu0 0
    %1074 = vmatprep.subr.bf16.mxu0 0
    %1075 = vmatpush1.bf16.xpose.msra.mxu0 0
    %1076 = vmatprep.subr.bf16.mxu0 0
    %1077 = vmatpush1.bf16.xpose.msra.mxu0 0
    %1078 = vmatprep.subr.bf16.mxu0 0
    %1079 = vmatpush1.bf16.xpose.msra.mxu0 0
    %1080 = vmatprep.subr.bf16.mxu0 0
    %1081 = vmatpush1.bf16.xpose.msra.mxu0 0
    %1082 = vmatprep.subr.bf16.mxu0 0
    %1083 = vmatpush1.bf16.xpose.msra.mxu0 %v1068
    %1084 = vmatprep.subr.bf16.mxu0 0
    %1085 = vmatpush1.bf16.xpose.msra.mxu0 %v1065
    %1086 = vmatprep.subr.bf16.mxu0 0
    %1087 = vmatpush2.bf16.xpose.msra.mxu0 0
    %1088 = vmatprep.subr.bf16.mxu0 0
    %1089 = vmatpush2.bf16.xpose.msra.mxu0 0
    %1090 = vmatprep.subr.bf16.mxu0 0
    %1091 = vmatpush2.bf16.xpose.msra.mxu0 0
    %1092 = vmatprep.subr.bf16.mxu0 0
    %1093 = vmatpush2.bf16.xpose.msra.mxu0 0
    %1094 = vmatprep.subr.bf16.mxu0 0
    %1095 = vmatpush2.bf16.xpose.msra.mxu0 0
    %1096 = vmatprep.subr.bf16.mxu0 0
    %1097 = vmatpush2.bf16.xpose.msra.mxu0 0
    %1098 = vmatprep.subr.bf16.mxu0 0
    %1099 = vmatpush2.bf16.xpose.msra.mxu0 0
    %1100 = vmatprep.subr.bf16.mxu0 0
    %1101 = vmatpush2.bf16.xpose.msra.mxu0 0
    %1102 = vmatprep.mubr.bf16.mxu0 0
    %1103 = vmatmul.mubr.bf16.gmra.mxu0 %v1062
    %v1104 = vpop.f32.mrf.mxu0
    %v1105 = vadd.f32 0.0, %v1104
    %v1106 = vpop.f32.mrf.mxu0
    %v1107 = vpop.f32.mrf.mxu0
    %v1108 = vpop.f32.mrf.mxu0
    %1109 = vdwg.mxu0
    %v1110 = vsub.f32 %v1105, 1.0
    %v1111 = vmul.f32 %v1110, 10.0
    %v1112 = vmul.f32 %v1111, 1.442695
    %v1113 = vpow.pop %v1112
    %v1114 = vld [vmem:[%s11] sm:$0xff]
    %v1115 = vld [vmem:[%s11 + $0x8] sm:$0xff]
    %v1116 = vld [vmem:[%s11 + $0x10] sm:$0xff]
    %v1117 = vld [vmem:[%s11 + $0x18] sm:$0xff]
    %v1118 = vld [vmem:[%s12] sm:$0xff]
    %v1119 = vld [vmem:[%s13] sm:$0x3]
    // While loop
    $region62: #{tpu_custom_call.1} parent=1 // loop_pre_header
      _
    $region63: #{tpu_custom_call.1} parent=1 // loop_header
      %s1121 = sphi 0, %s1738
      %s1122 = sphi 1e+30, %s1737
      %v1123 = vphi 1.0, %v1578
      %v1124 = vphi 1.0, %v1724
      %p1125 = scmp.lt.s32.totalorder %s1121, 50
      %p1126 = scmp.ge.f32.partialorder %s1122, 0.01
      %p1127 = pnand %p1125, %p1126
      %p1128 = pneg %p1127
    $region64: #{tpu_custom_call.1} parent=1 // loop_header_branch
      %1130 = sbr.rel (%p1127) target = $region68
    $region65: #{tpu_custom_call.1} parent=1 // loop_body
      %v1132 = vsel %vm970, %v1124, 0
      %1134 = vmatprep.subr.mxu0 0.0
      %1135 = vmatpush1.msra.mxu0 0.0
      %1136 = vmatprep.subr.mxu0 0.0
      %1137 = vmatpush1.msra.mxu0 0.0
      %1138 = vmatprep.subr.mxu0 0.0
      %1139 = vmatpush1.msra.mxu0 0.0
      %1140 = vmatprep.subr.mxu0 0.0
      %1141 = vmatpush1.msra.mxu0 0.0
      %1142 = vmatprep.subr.mxu0 0.0
      %1143 = vmatpush1.msra.mxu0 0.0
      %1144 = vmatprep.subr.mxu0 0.0
      %1145 = vmatpush1.msra.mxu0 0.0
      %1146 = vmatprep.subr.mxu0 0.0
      %1147 = vmatpush1.msra.mxu0 0.0
      %1148 = vmatprep.subr.mxu0 0.0
      %1149 = vmatpush1.msra.mxu0 0.0
      %1150 = vmatprep.subr.mxu0 0.0
      %1151 = vmatpush1.msra.mxu0 0.0
      %1152 = vmatprep.subr.mxu0 0.0
      %1153 = vmatpush1.msra.mxu0 0.0
      %1154 = vmatprep.subr.mxu0 0.0
      %1155 = vmatpush1.msra.mxu0 0.0
      %1156 = vmatprep.subr.mxu0 0.0
      %1157 = vmatpush1.msra.mxu0 0.0
      %1158 = vmatprep.subr.mxu0 0.0
      %1159 = vmatpush1.msra.mxu0 0.0
      %1160 = vmatprep.subr.mxu0 0.0
      %1161 = vmatpush1.msra.mxu0 0.0
      %1162 = vmatprep.subr.mxu0 0.0
      %1163 = vmatpush1.msra.mxu0 0.0
      %1164 = vmatprep.subr.mxu0 0.0
      %1165 = vmatpush1.msra.mxu0 %v1132
      %1166 = vmatprep.subr.mxu0 0.0
      %1167 = vmatpush2.msra.mxu0 0.0
      %1168 = vmatprep.subr.mxu0 0.0
      %1169 = vmatpush2.msra.mxu0 0.0
      %1170 = vmatprep.subr.mxu0 0.0
      %1171 = vmatpush2.msra.mxu0 0.0
      %1172 = vmatprep.subr.mxu0 0.0
      %1173 = vmatpush2.msra.mxu0 0.0
      %1174 = vmatprep.subr.mxu0 0.0
      %1175 = vmatpush2.msra.mxu0 0.0
      %1176 = vmatprep.subr.mxu0 0.0
      %1177 = vmatpush2.msra.mxu0 0.0
      %1178 = vmatprep.subr.mxu0 0.0
      %1179 = vmatpush2.msra.mxu0 0.0
      %1180 = vmatprep.subr.mxu0 0.0
      %1181 = vmatpush2.msra.mxu0 0.0
      %1182 = vmatprep.subr.mxu0 0.0
      %1183 = vmatpush2.msra.mxu0 0.0
      %1184 = vmatprep.subr.mxu0 0.0
      %1185 = vmatpush2.msra.mxu0 0.0
      %1186 = vmatprep.subr.mxu0 0.0
      %1187 = vmatpush2.msra.mxu0 0.0
      %1188 = vmatprep.subr.mxu0 0.0
      %1189 = vmatpush2.msra.mxu0 0.0
      %1190 = vmatprep.subr.mxu0 0.0
      %1191 = vmatpush2.msra.mxu0 0.0
      %1192 = vmatprep.subr.mxu0 0.0
      %1193 = vmatpush2.msra.mxu0 0.0
      %1194 = vmatprep.subr.mxu0 0.0
      %1195 = vmatpush2.msra.mxu0 0.0
      %1196 = vmatprep.subr.mxu0 0.0
      %1197 = vmatpush2.msra.mxu0 0.0
      %1198 = vmatprep.mubr.f32.mxu0 0.0
      %1199 = vmatmul.mubr.f32.gmra.mxu0 %v968
      %v1200 = vpop.f32.mrf.mxu0
      %v1201 = vadd.f32 0.0, %v1200
      %v1202 = vpop.f32.mrf.mxu0
      %1203 = vdwg.mxu0
      %v1204 = vmul.f32 %v1113, %v1201
      %v1206 = vsel %vm57, %v1204, 0
      %1208 = vmatprep.subr.mxu0 0.0
      %1209 = vmatpush1.msra.mxu0 0.0
      %1210 = vmatprep.subr.mxu0 0.0
      %1211 = vmatpush1.msra.mxu0 0.0
      %1212 = vmatprep.subr.mxu0 0.0
      %1213 = vmatpush1.msra.mxu0 0.0
      %1214 = vmatprep.subr.mxu0 0.0
      %1215 = vmatpush1.msra.mxu0 0.0
      %1216 = vmatprep.subr.mxu0 0.0
      %1217 = vmatpush1.msra.mxu0 0.0
      %1218 = vmatprep.subr.mxu0 0.0
      %1219 = vmatpush1.msra.mxu0 0.0
      %1220 = vmatprep.subr.mxu0 0.0
      %1221 = vmatpush1.msra.mxu0 0.0
      %1222 = vmatprep.subr.mxu0 0.0
      %1223 = vmatpush1.msra.mxu0 0.0
      %1224 = vmatprep.subr.mxu0 0.0
      %1225 = vmatpush1.msra.mxu0 0.0
      %1226 = vmatprep.subr.mxu0 0.0
      %1227 = vmatpush1.msra.mxu0 0.0
      %1228 = vmatprep.subr.mxu0 0.0
      %1229 = vmatpush1.msra.mxu0 0.0
      %1230 = vmatprep.subr.mxu0 0.0
      %1231 = vmatpush1.msra.mxu0 0.0
      %1232 = vmatprep.subr.mxu0 0.0
      %1233 = vmatpush1.msra.mxu0 %v1117
      %1234 = vmatprep.subr.mxu0 0.0
      %1235 = vmatpush1.msra.mxu0 %v1116
      %1236 = vmatprep.subr.mxu0 0.0
      %1237 = vmatpush1.msra.mxu0 %v1115
      %1238 = vmatprep.subr.mxu0 0.0
      %1239 = vmatpush1.msra.mxu0 %v1114
      %1240 = vmatprep.subr.mxu0 0.0
      %1241 = vmatpush2.msra.mxu0 0.0
      %1242 = vmatprep.subr.mxu0 0.0
      %1243 = vmatpush2.msra.mxu0 0.0
      %1244 = vmatprep.subr.mxu0 0.0
      %1245 = vmatpush2.msra.mxu0 0.0
      %1246 = vmatprep.subr.mxu0 0.0
      %1247 = vmatpush2.msra.mxu0 0.0
      %1248 = vmatprep.subr.mxu0 0.0
      %1249 = vmatpush2.msra.mxu0 0.0
      %1250 = vmatprep.subr.mxu0 0.0
      %1251 = vmatpush2.msra.mxu0 0.0
      %1252 = vmatprep.subr.mxu0 0.0
      %1253 = vmatpush2.msra.mxu0 0.0
      %1254 = vmatprep.subr.mxu0 0.0
      %1255 = vmatpush2.msra.mxu0 0.0
      %1256 = vmatprep.subr.mxu0 0.0
      %1257 = vmatpush2.msra.mxu0 0.0
      %1258 = vmatprep.subr.mxu0 0.0
      %1259 = vmatpush2.msra.mxu0 0.0
      %1260 = vmatprep.subr.mxu0 0.0
      %1261 = vmatpush2.msra.mxu0 0.0
      %1262 = vmatprep.subr.mxu0 0.0
      %1263 = vmatpush2.msra.mxu0 0.0
      %1264 = vmatprep.subr.mxu0 0.0
      %1265 = vmatpush2.msra.mxu0 0.0
      %1266 = vmatprep.subr.mxu0 0.0
      %1267 = vmatpush2.msra.mxu0 0.0
      %1268 = vmatprep.subr.mxu0 0.0
      %1269 = vmatpush2.msra.mxu0 0.0
      %1270 = vmatprep.subr.mxu0 0.0
      %1271 = vmatpush2.msra.mxu0 0.0
      %1272 = vmatprep.mubr.f32.mxu0 0.0
      %1273 = vmatmul.mubr.f32.gmra.mxu0 %v1206
      %v1274 = vpop.f32.mrf.mxu0
      %v1275 = vadd.f32 0.0, %v1274
      %v1276 = vpop.f32.mrf.mxu0
      %1277 = vdwg.mxu0
      %v1278 = vrcp.pop %v1275
      %v1279 = vmul.f32 %v1278, 0.25
      %vm1280 = vcmask 64512
      %v1282 = vsel %vm1280, %v1279, 0
      %1284 = vmatprep.subr.mxu0 0.0
      %1285 = vmatpush1.msra.mxu0 0.0
      %1286 = vmatprep.subr.mxu0 0.0
      %1287 = vmatpush1.msra.mxu0 0.0
      %1288 = vmatprep.subr.mxu0 0.0
      %1289 = vmatpush1.msra.mxu0 0.0
      %1290 = vmatprep.subr.mxu0 0.0
      %1291 = vmatpush1.msra.mxu0 0.0
      %1292 = vmatprep.subr.mxu0 0.0
      %1293 = vmatpush1.msra.mxu0 0.0
      %1294 = vmatprep.subr.mxu0 0.0
      %1295 = vmatpush1.msra.mxu0 0.0
      %1296 = vmatprep.subr.mxu0 0.0
      %1297 = vmatpush1.msra.mxu0 0.0
      %1298 = vmatprep.subr.mxu0 0.0
      %1299 = vmatpush1.msra.mxu0 0.0
      %1300 = vmatprep.subr.mxu0 0.0
      %1301 = vmatpush1.msra.mxu0 0.0
      %1302 = vmatprep.subr.mxu0 0.0
      %1303 = vmatpush1.msra.mxu0 0.0
      %1304 = vmatprep.subr.mxu0 0.0
      %1305 = vmatpush1.msra.mxu0 0.0
      %1306 = vmatprep.subr.mxu0 0.0
      %1307 = vmatpush1.msra.mxu0 0.0
      %1308 = vmatprep.subr.mxu0 0.0
      %1309 = vmatpush1.msra.mxu0 0.0
      %1310 = vmatprep.subr.mxu0 0.0
      %1311 = vmatpush1.msra.mxu0 0.0
      %1312 = vmatprep.subr.mxu0 0.0
      %1313 = vmatpush1.msra.mxu0 0.0
      %1314 = vmatprep.subr.mxu0 0.0
      %1315 = vmatpush1.msra.mxu0 %v1118
      %1316 = vmatprep.subr.mxu0 0.0
      %1317 = vmatpush2.msra.mxu0 0.0
      %1318 = vmatprep.subr.mxu0 0.0
      %1319 = vmatpush2.msra.mxu0 0.0
      %1320 = vmatprep.subr.mxu0 0.0
      %1321 = vmatpush2.msra.mxu0 0.0
      %1322 = vmatprep.subr.mxu0 0.0
      %1323 = vmatpush2.msra.mxu0 0.0
      %1324 = vmatprep.subr.mxu0 0.0
      %1325 = vmatpush2.msra.mxu0 0.0
      %1326 = vmatprep.subr.mxu0 0.0
      %1327 = vmatpush2.msra.mxu0 0.0
      %1328 = vmatprep.subr.mxu0 0.0
      %1329 = vmatpush2.msra.mxu0 0.0
      %1330 = vmatprep.subr.mxu0 0.0
      %1331 = vmatpush2.msra.mxu0 0.0
      %1332 = vmatprep.subr.mxu0 0.0
      %1333 = vmatpush2.msra.mxu0 0.0
      %1334 = vmatprep.subr.mxu0 0.0
      %1335 = vmatpush2.msra.mxu0 0.0
      %1336 = vmatprep.subr.mxu0 0.0
      %1337 = vmatpush2.msra.mxu0 0.0
      %1338 = vmatprep.subr.mxu0 0.0
      %1339 = vmatpush2.msra.mxu0 0.0
      %1340 = vmatprep.subr.mxu0 0.0
      %1341 = vmatpush2.msra.mxu0 0.0
      %1342 = vmatprep.subr.mxu0 0.0
      %1343 = vmatpush2.msra.mxu0 0.0
      %1344 = vmatprep.subr.mxu0 0.0
      %1345 = vmatpush2.msra.mxu0 0.0
      %1346 = vmatprep.subr.mxu0 0.0
      %1347 = vmatpush2.msra.mxu0 0.0
      %1348 = vmatprep.mubr.f32.mxu0 0.0
      %1349 = vmatmul.mubr.f32.gmra.mxu0 %v1282
      %v1350 = vpop.f32.mrf.mxu0
      %v1351 = vadd.f32 0.0, %v1350
      %v1352 = vpop.f32.mrf.mxu0
      %1353 = vdwg.mxu0
      %v1354 = vmul.f32 %v1113, %v1351
      %v1356 = vsel %vm1280, %v1119, 0
      %1358 = vmatprep.subr.mxu0 0.0
      %1359 = vmatpush1.msra.mxu0 0.0
      %1360 = vmatprep.subr.mxu0 0.0
      %1361 = vmatpush1.msra.mxu0 0.0
      %1362 = vmatprep.subr.mxu0 0.0
      %1363 = vmatpush1.msra.mxu0 0.0
      %1364 = vmatprep.subr.mxu0 0.0
      %1365 = vmatpush1.msra.mxu0 0.0
      %1366 = vmatprep.subr.mxu0 0.0
      %1367 = vmatpush1.msra.mxu0 0.0
      %1368 = vmatprep.subr.mxu0 0.0
      %1369 = vmatpush1.msra.mxu0 0.0
      %1370 = vmatprep.subr.mxu0 0.0
      %1371 = vmatpush1.msra.mxu0 0.0
      %1372 = vmatprep.subr.mxu0 0.0
      %1373 = vmatpush1.msra.mxu0 0.0
      %1374 = vmatprep.subr.mxu0 0.0
      %1375 = vmatpush1.msra.mxu0 0.0
      %1376 = vmatprep.subr.mxu0 0.0
      %1377 = vmatpush1.msra.mxu0 0.0
      %1378 = vmatprep.subr.mxu0 0.0
      %1379 = vmatpush1.msra.mxu0 0.0
      %1380 = vmatprep.subr.mxu0 0.0
      %1381 = vmatpush1.msra.mxu0 0.0
      %1382 = vmatprep.subr.mxu0 0.0
      %1383 = vmatpush1.msra.mxu0 0.0
      %1384 = vmatprep.subr.mxu0 0.0
      %1385 = vmatpush1.msra.mxu0 0.0
      %1386 = vmatprep.subr.mxu0 0.0
      %1387 = vmatpush1.msra.mxu0 0.0
      %1388 = vmatprep.subr.mxu0 0.0
      %1389 = vmatpush1.msra.mxu0 %v1354
      %1390 = vmatprep.subr.mxu0 0.0
      %1391 = vmatpush2.msra.mxu0 0.0
      %1392 = vmatprep.subr.mxu0 0.0
      %1393 = vmatpush2.msra.mxu0 0.0
      %1394 = vmatprep.subr.mxu0 0.0
      %1395 = vmatpush2.msra.mxu0 0.0
      %1396 = vmatprep.subr.mxu0 0.0
      %1397 = vmatpush2.msra.mxu0 0.0
      %1398 = vmatprep.subr.mxu0 0.0
      %1399 = vmatpush2.msra.mxu0 0.0
      %1400 = vmatprep.subr.mxu0 0.0
      %1401 = vmatpush2.msra.mxu0 0.0
      %1402 = vmatprep.subr.mxu0 0.0
      %1403 = vmatpush2.msra.mxu0 0.0
      %1404 = vmatprep.subr.mxu0 0.0
      %1405 = vmatpush2.msra.mxu0 0.0
      %1406 = vmatprep.subr.mxu0 0.0
      %1407 = vmatpush2.msra.mxu0 0.0
      %1408 = vmatprep.subr.mxu0 0.0
      %1409 = vmatpush2.msra.mxu0 0.0
      %1410 = vmatprep.subr.mxu0 0.0
      %1411 = vmatpush2.msra.mxu0 0.0
      %1412 = vmatprep.subr.mxu0 0.0
      %1413 = vmatpush2.msra.mxu0 0.0
      %1414 = vmatprep.subr.mxu0 0.0
      %1415 = vmatpush2.msra.mxu0 0.0
      %1416 = vmatprep.subr.mxu0 0.0
      %1417 = vmatpush2.msra.mxu0 0.0
      %1418 = vmatprep.subr.mxu0 0.0
      %1419 = vmatpush2.msra.mxu0 0.0
      %1420 = vmatprep.subr.mxu0 0.0
      %1421 = vmatpush2.msra.mxu0 0.0
      %1422 = vmatprep.mubr.f32.mxu0 0.0
      %1423 = vmatmul.mubr.f32.gmra.mxu0 %v1356
      %v1424 = vpop.f32.mrf.mxu0
      %v1425 = vadd.f32 0.0, %v1424
      %v1426 = vpop.f32.mrf.mxu0
      %1427 = vdwg.mxu0
      %v1428 = vrcp.pop %v1425
      %v1429 = vmul.f32 %v1428, 0.25
      %v1431 = vsel %vm970, %v1429, 0
      %1433 = vmatprep.subr.mxu0 0.0
      %1434 = vmatpush1.msra.mxu0 0.0
      %1435 = vmatprep.subr.mxu0 0.0
      %1436 = vmatpush1.msra.mxu0 0.0
      %1437 = vmatprep.subr.mxu0 0.0
      %1438 = vmatpush1.msra.mxu0 0.0
      %1439 = vmatprep.subr.mxu0 0.0
      %1440 = vmatpush1.msra.mxu0 0.0
      %1441 = vmatprep.subr.mxu0 0.0
      %1442 = vmatpush1.msra.mxu0 0.0
      %1443 = vmatprep.subr.mxu0 0.0
      %1444 = vmatpush1.msra.mxu0 0.0
      %1445 = vmatprep.subr.mxu0 0.0
      %1446 = vmatpush1.msra.mxu0 0.0
      %1447 = vmatprep.subr.mxu0 0.0
      %1448 = vmatpush1.msra.mxu0 0.0
      %1449 = vmatprep.subr.mxu0 0.0
      %1450 = vmatpush1.msra.mxu0 0.0
      %1451 = vmatprep.subr.mxu0 0.0
      %1452 = vmatpush1.msra.mxu0 0.0
      %1453 = vmatprep.subr.mxu0 0.0
      %1454 = vmatpush1.msra.mxu0 0.0
      %1455 = vmatprep.subr.mxu0 0.0
      %1456 = vmatpush1.msra.mxu0 0.0
      %1457 = vmatprep.subr.mxu0 0.0
      %1458 = vmatpush1.msra.mxu0 0.0
      %1459 = vmatprep.subr.mxu0 0.0
      %1460 = vmatpush1.msra.mxu0 0.0
      %1461 = vmatprep.subr.mxu0 0.0
      %1462 = vmatpush1.msra.mxu0 0.0
      %1463 = vmatprep.subr.mxu0 0.0
      %1464 = vmatpush1.msra.mxu0 %v1431
      %1465 = vmatprep.subr.mxu0 0.0
      %1466 = vmatpush2.msra.mxu0 0.0
      %1467 = vmatprep.subr.mxu0 0.0
      %1468 = vmatpush2.msra.mxu0 0.0
      %1469 = vmatprep.subr.mxu0 0.0
      %1470 = vmatpush2.msra.mxu0 0.0
      %1471 = vmatprep.subr.mxu0 0.0
      %1472 = vmatpush2.msra.mxu0 0.0
      %1473 = vmatprep.subr.mxu0 0.0
      %1474 = vmatpush2.msra.mxu0 0.0
      %1475 = vmatprep.subr.mxu0 0.0
      %1476 = vmatpush2.msra.mxu0 0.0
      %1477 = vmatprep.subr.mxu0 0.0
      %1478 = vmatpush2.msra.mxu0 0.0
      %1479 = vmatprep.subr.mxu0 0.0
      %1480 = vmatpush2.msra.mxu0 0.0
      %1481 = vmatprep.subr.mxu0 0.0
      %1482 = vmatpush2.msra.mxu0 0.0
      %1483 = vmatprep.subr.mxu0 0.0
      %1484 = vmatpush2.msra.mxu0 0.0
      %1485 = vmatprep.subr.mxu0 0.0
      %1486 = vmatpush2.msra.mxu0 0.0
      %1487 = vmatprep.subr.mxu0 0.0
      %1488 = vmatpush2.msra.mxu0 0.0
      %1489 = vmatprep.subr.mxu0 0.0
      %1490 = vmatpush2.msra.mxu0 0.0
      %1491 = vmatprep.subr.mxu0 0.0
      %1492 = vmatpush2.msra.mxu0 0.0
      %1493 = vmatprep.subr.mxu0 0.0
      %1494 = vmatpush2.msra.mxu0 0.0
      %1495 = vmatprep.subr.mxu0 0.0
      %1496 = vmatpush2.msra.mxu0 0.0
      %1497 = vmatprep.mubr.f32.mxu0 0.0
      %1498 = vmatmul.mubr.f32.gmra.mxu0 %v968
      %v1499 = vpop.f32.mrf.mxu0
      %v1500 = vadd.f32 0.0, %v1499
      %v1501 = vpop.f32.mrf.mxu0
      %1502 = vdwg.mxu0
      %v1503 = vmul.f32 %v1113, %v1500
      %v1505 = vsel %vm57, %v1503, 0
      %1507 = vmatprep.subr.mxu0 0.0
      %1508 = vmatpush1.msra.mxu0 0.0
      %1509 = vmatprep.subr.mxu0 0.0
      %1510 = vmatpush1.msra.mxu0 0.0
      %1511 = vmatprep.subr.mxu0 0.0
      %1512 = vmatpush1.msra.mxu0 0.0
      %1513 = vmatprep.subr.mxu0 0.0
      %1514 = vmatpush1.msra.mxu0 0.0
      %1515 = vmatprep.subr.mxu0 0.0
      %1516 = vmatpush1.msra.mxu0 0.0
      %1517 = vmatprep.subr.mxu0 0.0
      %1518 = vmatpush1.msra.mxu0 0.0
      %1519 = vmatprep.subr.mxu0 0.0
      %1520 = vmatpush1.msra.mxu0 0.0
      %1521 = vmatprep.subr.mxu0 0.0
      %1522 = vmatpush1.msra.mxu0 0.0
      %1523 = vmatprep.subr.mxu0 0.0
      %1524 = vmatpush1.msra.mxu0 0.0
      %1525 = vmatprep.subr.mxu0 0.0
      %1526 = vmatpush1.msra.mxu0 0.0
      %1527 = vmatprep.subr.mxu0 0.0
      %1528 = vmatpush1.msra.mxu0 0.0
      %1529 = vmatprep.subr.mxu0 0.0
      %1530 = vmatpush1.msra.mxu0 0.0
      %1531 = vmatprep.subr.mxu0 0.0
      %1532 = vmatpush1.msra.mxu0 %v1117
      %1533 = vmatprep.subr.mxu0 0.0
      %1534 = vmatpush1.msra.mxu0 %v1116
      %1535 = vmatprep.subr.mxu0 0.0
      %1536 = vmatpush1.msra.mxu0 %v1115
      %1537 = vmatprep.subr.mxu0 0.0
      %1538 = vmatpush1.msra.mxu0 %v1114
      %1539 = vmatprep.subr.mxu0 0.0
      %1540 = vmatpush2.msra.mxu0 0.0
      %1541 = vmatprep.subr.mxu0 0.0
      %1542 = vmatpush2.msra.mxu0 0.0
      %1543 = vmatprep.subr.mxu0 0.0
      %1544 = vmatpush2.msra.mxu0 0.0
      %1545 = vmatprep.subr.mxu0 0.0
      %1546 = vmatpush2.msra.mxu0 0.0
      %1547 = vmatprep.subr.mxu0 0.0
      %1548 = vmatpush2.msra.mxu0 0.0
      %1549 = vmatprep.subr.mxu0 0.0
      %1550 = vmatpush2.msra.mxu0 0.0
      %1551 = vmatprep.subr.mxu0 0.0
      %1552 = vmatpush2.msra.mxu0 0.0
      %1553 = vmatprep.subr.mxu0 0.0
      %1554 = vmatpush2.msra.mxu0 0.0
      %1555 = vmatprep.subr.mxu0 0.0
      %1556 = vmatpush2.msra.mxu0 0.0
      %1557 = vmatprep.subr.mxu0 0.0
      %1558 = vmatpush2.msra.mxu0 0.0
      %1559 = vmatprep.subr.mxu0 0.0
      %1560 = vmatpush2.msra.mxu0 0.0
      %1561 = vmatprep.subr.mxu0 0.0
      %1562 = vmatpush2.msra.mxu0 0.0
      %1563 = vmatprep.subr.mxu0 0.0
      %1564 = vmatpush2.msra.mxu0 0.0
      %1565 = vmatprep.subr.mxu0 0.0
      %1566 = vmatpush2.msra.mxu0 0.0
      %1567 = vmatprep.subr.mxu0 0.0
      %1568 = vmatpush2.msra.mxu0 0.0
      %1569 = vmatprep.subr.mxu0 0.0
      %1570 = vmatpush2.msra.mxu0 0.0
      %1571 = vmatprep.mubr.f32.mxu0 0.0
      %1572 = vmatmul.mubr.f32.gmra.mxu0 %v1505
      %v1573 = vpop.f32.mrf.mxu0
      %v1574 = vadd.f32 0.0, %v1573
      %v1575 = vpop.f32.mrf.mxu0
      %1576 = vdwg.mxu0
      %v1577 = vrcp.pop %v1574
      %v1578 = vmul.f32 %v1577, 0.25
      %v1580 = vsel %vm1280, %v1578, 0
      %1582 = vmatprep.subr.mxu0 0.0
      %1583 = vmatpush1.msra.mxu0 0.0
      %1584 = vmatprep.subr.mxu0 0.0
      %1585 = vmatpush1.msra.mxu0 0.0
      %1586 = vmatprep.subr.mxu0 0.0
      %1587 = vmatpush1.msra.mxu0 0.0
      %1588 = vmatprep.subr.mxu0 0.0
      %1589 = vmatpush1.msra.mxu0 0.0
      %1590 = vmatprep.subr.mxu0 0.0
      %1591 = vmatpush1.msra.mxu0 0.0
      %1592 = vmatprep.subr.mxu0 0.0
      %1593 = vmatpush1.msra.mxu0 0.0
      %1594 = vmatprep.subr.mxu0 0.0
      %1595 = vmatpush1.msra.mxu0 0.0
      %1596 = vmatprep.subr.mxu0 0.0
      %1597 = vmatpush1.msra.mxu0 0.0
      %1598 = vmatprep.subr.mxu0 0.0
      %1599 = vmatpush1.msra.mxu0 0.0
      %1600 = vmatprep.subr.mxu0 0.0
      %1601 = vmatpush1.msra.mxu0 0.0
      %1602 = vmatprep.subr.mxu0 0.0
      %1603 = vmatpush1.msra.mxu0 0.0
      %1604 = vmatprep.subr.mxu0 0.0
      %1605 = vmatpush1.msra.mxu0 0.0
      %1606 = vmatprep.subr.mxu0 0.0
      %1607 = vmatpush1.msra.mxu0 0.0
      %1608 = vmatprep.subr.mxu0 0.0
      %1609 = vmatpush1.msra.mxu0 0.0
      %1610 = vmatprep.subr.mxu0 0.0
      %1611 = vmatpush1.msra.mxu0 0.0
      %1612 = vmatprep.subr.mxu0 0.0
      %1613 = vmatpush1.msra.mxu0 %v1118
      %1614 = vmatprep.subr.mxu0 0.0
      %1615 = vmatpush2.msra.mxu0 0.0
      %1616 = vmatprep.subr.mxu0 0.0
      %1617 = vmatpush2.msra.mxu0 0.0
      %1618 = vmatprep.subr.mxu0 0.0
      %1619 = vmatpush2.msra.mxu0 0.0
      %1620 = vmatprep.subr.mxu0 0.0
      %1621 = vmatpush2.msra.mxu0 0.0
      %1622 = vmatprep.subr.mxu0 0.0
      %1623 = vmatpush2.msra.mxu0 0.0
      %1624 = vmatprep.subr.mxu0 0.0
      %1625 = vmatpush2.msra.mxu0 0.0
      %1626 = vmatprep.subr.mxu0 0.0
      %1627 = vmatpush2.msra.mxu0 0.0
      %1628 = vmatprep.subr.mxu0 0.0
      %1629 = vmatpush2.msra.mxu0 0.0
      %1630 = vmatprep.subr.mxu0 0.0
      %1631 = vmatpush2.msra.mxu0 0.0
      %1632 = vmatprep.subr.mxu0 0.0
      %1633 = vmatpush2.msra.mxu0 0.0
      %1634 = vmatprep.subr.mxu0 0.0
      %1635 = vmatpush2.msra.mxu0 0.0
      %1636 = vmatprep.subr.mxu0 0.0
      %1637 = vmatpush2.msra.mxu0 0.0
      %1638 = vmatprep.subr.mxu0 0.0
      %1639 = vmatpush2.msra.mxu0 0.0
      %1640 = vmatprep.subr.mxu0 0.0
      %1641 = vmatpush2.msra.mxu0 0.0
      %1642 = vmatprep.subr.mxu0 0.0
      %1643 = vmatpush2.msra.mxu0 0.0
      %1644 = vmatprep.subr.mxu0 0.0
      %1645 = vmatpush2.msra.mxu0 0.0
      %1646 = vmatprep.mubr.f32.mxu0 0.0
      %1647 = vmatmul.mubr.f32.gmra.mxu0 %v1580
      %v1648 = vpop.f32.mrf.mxu0
      %v1649 = vadd.f32 0.0, %v1648
      %v1650 = vpop.f32.mrf.mxu0
      %1651 = vdwg.mxu0
      %v1652 = vmul.f32 %v1113, %v1649
      %1653 = vmatprep.subr.mxu0 0.0
      %1654 = vmatpush1.msra.mxu0 0.0
      %1655 = vmatprep.subr.mxu0 0.0
      %1656 = vmatpush1.msra.mxu0 0.0
      %1657 = vmatprep.subr.mxu0 0.0
      %1658 = vmatpush1.msra.mxu0 0.0
      %1659 = vmatprep.subr.mxu0 0.0
      %1660 = vmatpush1.msra.mxu0 0.0
      %1661 = vmatprep.subr.mxu0 0.0
      %1662 = vmatpush1.msra.mxu0 0.0
      %1663 = vmatprep.subr.mxu0 0.0
      %1664 = vmatpush1.msra.mxu0 0.0
      %1665 = vmatprep.subr.mxu0 0.0
      %1666 = vmatpush1.msra.mxu0 0.0
      %1667 = vmatprep.subr.mxu0 0.0
      %1668 = vmatpush1.msra.mxu0 0.0
      %1669 = vmatprep.subr.mxu0 0.0
      %1670 = vmatpush1.msra.mxu0 0.0
      %1671 = vmatprep.subr.mxu0 0.0
      %1672 = vmatpush1.msra.mxu0 0.0
      %1673 = vmatprep.subr.mxu0 0.0
      %1674 = vmatpush1.msra.mxu0 0.0
      %1675 = vmatprep.subr.mxu0 0.0
      %1676 = vmatpush1.msra.mxu0 0.0
      %1677 = vmatprep.subr.mxu0 0.0
      %1678 = vmatpush1.msra.mxu0 0.0
      %1679 = vmatprep.subr.mxu0 0.0
      %1680 = vmatpush1.msra.mxu0 0.0
      %1681 = vmatprep.subr.mxu0 0.0
      %1682 = vmatpush1.msra.mxu0 0.0
      %1683 = vmatprep.subr.mxu0 0.0
      %1684 = vmatpush1.msra.mxu0 %v1652
      %1685 = vmatprep.subr.mxu0 0.0
      %1686 = vmatpush2.msra.mxu0 0.0
      %1687 = vmatprep.subr.mxu0 0.0
      %1688 = vmatpush2.msra.mxu0 0.0
      %1689 = vmatprep.subr.mxu0 0.0
      %1690 = vmatpush2.msra.mxu0 0.0
      %1691 = vmatprep.subr.mxu0 0.0
      %1692 = vmatpush2.msra.mxu0 0.0
      %1693 = vmatprep.subr.mxu0 0.0
      %1694 = vmatpush2.msra.mxu0 0.0
      %1695 = vmatprep.subr.mxu0 0.0
      %1696 = vmatpush2.msra.mxu0 0.0
      %1697 = vmatprep.subr.mxu0 0.0
      %1698 = vmatpush2.msra.mxu0 0.0
      %1699 = vmatprep.subr.mxu0 0.0
      %1700 = vmatpush2.msra.mxu0 0.0
      %1701 = vmatprep.subr.mxu0 0.0
      %1702 = vmatpush2.msra.mxu0 0.0
      %1703 = vmatprep.subr.mxu0 0.0
      %1704 = vmatpush2.msra.mxu0 0.0
      %1705 = vmatprep.subr.mxu0 0.0
      %1706 = vmatpush2.msra.mxu0 0.0
      %1707 = vmatprep.subr.mxu0 0.0
      %1708 = vmatpush2.msra.mxu0 0.0
      %1709 = vmatprep.subr.mxu0 0.0
      %1710 = vmatpush2.msra.mxu0 0.0
      %1711 = vmatprep.subr.mxu0 0.0
      %1712 = vmatpush2.msra.mxu0 0.0
      %1713 = vmatprep.subr.mxu0 0.0
      %1714 = vmatpush2.msra.mxu0 0.0
      %1715 = vmatprep.subr.mxu0 0.0
      %1716 = vmatpush2.msra.mxu0 0.0
      %1717 = vmatprep.mubr.f32.mxu0 0.0
      %1718 = vmatmul.mubr.f32.gmra.mxu0 %v1356
      %v1719 = vpop.f32.mrf.mxu0
      %v1720 = vadd.f32 0.0, %v1719
      %v1721 = vpop.f32.mrf.mxu0
      %1722 = vdwg.mxu0
      %v1723 = vrcp.pop %v1720
      %v1724 = vmul.f32 %v1723, 0.25
      %v1725 = vsub.f32 %v1578, %v1279
      %v1726 = vand.u32 2147483647, %v1725
      %v1727 = vsel %vm1280, %v1726, 0.0
      %1728 = vadd.xlane.f32.xlu0 %v1727
      %v1729 = vpop.xlane.xlu0 %1728
      %v1730 = vrot.slane %v1729, 4
      %v1731 = vadd.f32 %v1729, %v1730
      %v1732 = vrot.slane %v1731, 2
      %v1733 = vadd.f32 %v1731, %v1732
      %v1734 = vrot.slane %v1733, 1
      %v1735 = vadd.f32 %v1733, %v1734
      %s1736 = vtos %v1735
      %s1737 = smul.f32 %s1736, 0.015625
      %s1738 = sadd.s32 %s1121, 1
    $region66: #{tpu_custom_call.1} parent=1 // loop_footer
      _
    $region67: #{tpu_custom_call.1} parent=1 // loop_footer_branch
      %1120 = sbr.rel target = $region63
    $region68: #{tpu_custom_call.1} parent=1 // loop_exit
      _
    %vm1739 = vcmask 64512
    %v1741 = vsel %vm1739, %v1123, 0
    %1743 = vmatprep.subr.mxu0 0.0
    %1744 = vmatpush1.msra.mxu0 0.0
    %1745 = vmatprep.subr.mxu0 0.0
    %1746 = vmatpush1.msra.mxu0 0.0
    %1747 = vmatprep.subr.mxu0 0.0
    %1748 = vmatpush1.msra.mxu0 0.0
    %1749 = vmatprep.subr.mxu0 0.0
    %1750 = vmatpush1.msra.mxu0 0.0
    %1751 = vmatprep.subr.mxu0 0.0
    %1752 = vmatpush1.msra.mxu0 0.0
    %1753 = vmatprep.subr.mxu0 0.0
    %1754 = vmatpush1.msra.mxu0 0.0
    %1755 = vmatprep.subr.mxu0 0.0
    %1756 = vmatpush1.msra.mxu0 0.0
    %1757 = vmatprep.subr.mxu0 0.0
    %1758 = vmatpush1.msra.mxu0 0.0
    %1759 = vmatprep.subr.mxu0 0.0
    %1760 = vmatpush1.msra.mxu0 0.0
    %1761 = vmatprep.subr.mxu0 0.0
    %1762 = vmatpush1.msra.mxu0 0.0
    %1763 = vmatprep.subr.mxu0 0.0
    %1764 = vmatpush1.msra.mxu0 0.0
    %1765 = vmatprep.subr.mxu0 0.0
    %1766 = vmatpush1.msra.mxu0 0.0
    %1767 = vmatprep.subr.mxu0 0.0
    %1768 = vmatpush1.msra.mxu0 0.0
    %1769 = vmatprep.subr.mxu0 0.0
    %1770 = vmatpush1.msra.mxu0 0.0
    %1771 = vmatprep.subr.mxu0 0.0
    %1772 = vmatpush1.msra.mxu0 0.0
    %1773 = vmatprep.subr.mxu0 0.0
    %1774 = vmatpush1.msra.mxu0 %v1118
    %1775 = vmatprep.subr.mxu0 0.0
    %1776 = vmatpush2.msra.mxu0 0.0
    %1777 = vmatprep.subr.mxu0 0.0
    %1778 = vmatpush2.msra.mxu0 0.0
    %1779 = vmatprep.subr.mxu0 0.0
    %1780 = vmatpush2.msra.mxu0 0.0
    %1781 = vmatprep.subr.mxu0 0.0
    %1782 = vmatpush2.msra.mxu0 0.0
    %1783 = vmatprep.subr.mxu0 0.0
    %1784 = vmatpush2.msra.mxu0 0.0
    %1785 = vmatprep.subr.mxu0 0.0
    %1786 = vmatpush2.msra.mxu0 0.0
    %1787 = vmatprep.subr.mxu0 0.0
    %1788 = vmatpush2.msra.mxu0 0.0
    %1789 = vmatprep.subr.mxu0 0.0
    %1790 = vmatpush2.msra.mxu0 0.0
    %1791 = vmatprep.subr.mxu0 0.0
    %1792 = vmatpush2.msra.mxu0 0.0
    %1793 = vmatprep.subr.mxu0 0.0
    %1794 = vmatpush2.msra.mxu0 0.0
    %1795 = vmatprep.subr.mxu0 0.0
    %1796 = vmatpush2.msra.mxu0 0.0
    %1797 = vmatprep.subr.mxu0 0.0
    %1798 = vmatpush2.msra.mxu0 0.0
    %1799 = vmatprep.subr.mxu0 0.0
    %1800 = vmatpush2.msra.mxu0 0.0
    %1801 = vmatprep.subr.mxu0 0.0
    %1802 = vmatpush2.msra.mxu0 0.0
    %1803 = vmatprep.subr.mxu0 0.0
    %1804 = vmatpush2.msra.mxu0 0.0
    %1805 = vmatprep.subr.mxu0 0.0
    %1806 = vmatpush2.msra.mxu0 0.0
    %1807 = vmatprep.mubr.f32.mxu0 0.0
    %1808 = vmatmul.mubr.f32.gmra.mxu0 %v1741
    %v1809 = vpop.f32.mrf.mxu0
    %v1810 = vadd.f32 0.0, %v1809
    %v1811 = vpop.f32.mrf.mxu0
    %1812 = vdwg.mxu0
    %v1814 = vsel %vm970, %v1124, 0
    %1816 = vmatprep.subr.mxu0 0.0
    %1817 = vmatpush1.msra.mxu0 0.0
    %1818 = vmatprep.subr.mxu0 0.0
    %1819 = vmatpush1.msra.mxu0 0.0
    %1820 = vmatprep.subr.mxu0 0.0
    %1821 = vmatpush1.msra.mxu0 0.0
    %1822 = vmatprep.subr.mxu0 0.0
    %1823 = vmatpush1.msra.mxu0 0.0
    %1824 = vmatprep.subr.mxu0 0.0
    %1825 = vmatpush1.msra.mxu0 0.0
    %1826 = vmatprep.subr.mxu0 0.0
    %1827 = vmatpush1.msra.mxu0 0.0
    %1828 = vmatprep.subr.mxu0 0.0
    %1829 = vmatpush1.msra.mxu0 0.0
    %1830 = vmatprep.subr.mxu0 0.0
    %1831 = vmatpush1.msra.mxu0 0.0
    %1832 = vmatprep.subr.mxu0 0.0
    %1833 = vmatpush1.msra.mxu0 0.0
    %1834 = vmatprep.subr.mxu0 0.0
    %1835 = vmatpush1.msra.mxu0 0.0
    %1836 = vmatprep.subr.mxu0 0.0
    %1837 = vmatpush1.msra.mxu0 0.0
    %1838 = vmatprep.subr.mxu0 0.0
    %1839 = vmatpush1.msra.mxu0 0.0
    %1840 = vmatprep.subr.mxu0 0.0
    %1841 = vmatpush1.msra.mxu0 0.0
    %1842 = vmatprep.subr.mxu0 0.0
    %1843 = vmatpush1.msra.mxu0 0.0
    %1844 = vmatprep.subr.mxu0 0.0
    %1845 = vmatpush1.msra.mxu0 0.0
    %1846 = vmatprep.subr.mxu0 0.0
    %1847 = vmatpush1.msra.mxu0 %v1814
    %1848 = vmatprep.subr.mxu0 0.0
    %1849 = vmatpush2.msra.mxu0 0.0
    %1850 = vmatprep.subr.mxu0 0.0
    %1851 = vmatpush2.msra.mxu0 0.0
    %1852 = vmatprep.subr.mxu0 0.0
    %1853 = vmatpush2.msra.mxu0 0.0
    %1854 = vmatprep.subr.mxu0 0.0
    %1855 = vmatpush2.msra.mxu0 0.0
    %1856 = vmatprep.subr.mxu0 0.0
    %1857 = vmatpush2.msra.mxu0 0.0
    %1858 = vmatprep.subr.mxu0 0.0
    %1859 = vmatpush2.msra.mxu0 0.0
    %1860 = vmatprep.subr.mxu0 0.0
    %1861 = vmatpush2.msra.mxu0 0.0
    %1862 = vmatprep.subr.mxu0 0.0
    %1863 = vmatpush2.msra.mxu0 0.0
    %1864 = vmatprep.subr.mxu0 0.0
    %1865 = vmatpush2.msra.mxu0 0.0
    %1866 = vmatprep.subr.mxu0 0.0
    %1867 = vmatpush2.msra.mxu0 0.0
    %1868 = vmatprep.subr.mxu0 0.0
    %1869 = vmatpush2.msra.mxu0 0.0
    %1870 = vmatprep.subr.mxu0 0.0
    %1871 = vmatpush2.msra.mxu0 0.0
    %1872 = vmatprep.subr.mxu0 0.0
    %1873 = vmatpush2.msra.mxu0 0.0
    %1874 = vmatprep.subr.mxu0 0.0
    %1875 = vmatpush2.msra.mxu0 0.0
    %1876 = vmatprep.subr.mxu0 0.0
    %1877 = vmatpush2.msra.mxu0 0.0
    %1878 = vmatprep.subr.mxu0 0.0
    %1879 = vmatpush2.msra.mxu0 0.0
    %1880 = vmatprep.mubr.f32.mxu0 0.0
    %1881 = vmatmul.mubr.f32.gmra.mxu0 %v968
    %v1882 = vpop.f32.mrf.mxu0
    %v1883 = vadd.f32 0.0, %v1882
    %v1884 = vpop.f32.mrf.mxu0
    %1885 = vdwg.mxu0
    %v1886 = vmul.f32 %v1810, %v1883
    %v1887 = vmul.f32 %v1886, %v1113
    %vm1888 = vcmp.ne.f32.partialorder %v1887, %v1887
    %v1889 = vsel %vm1888, 1, 0
    %v1890 = vcvt.s32.f32 %v1889
    %v1891 = vsel %vm57, %v1890, -inf
    %1892 = vmax.xlane.f32.xlu0 %v1891
    %v1893 = vpop.xlane.xlu0 %1892
    %v1894 = vrot.slane %v1893, 4
    %v1895 = vmax.f32 %v1893, %v1894
    %v1896 = vrot.slane %v1895, 2
    %v1897 = vmax.f32 %v1895, %v1896
    %v1898 = vrot.slane %v1897, 1
    %v1899 = vmax.f32 %v1897, %v1898
    %s1900 = vtos %v1899
    %p1901 = scmp.gt.f32.partialorder %s1900, 0.0
    %s1902 = scalar_select %p1901, 1, 0
    %v1903 = vstv %s1902
    %vm1904 = vcmp.eq.s32.totalorder %v1903, 1
    %v1905 = vsel %vm1904, %v1113, %v1887
    %v1906 = vmul.f32 %v1905, %v1105
    %v1908 = vsel %vm1739, %v1119, 0
    %1910 = vmatprep.subr.mxu0 0.0
    %1911 = vmatpush1.msra.mxu0 0.0
    %1912 = vmatprep.subr.mxu0 0.0
    %1913 = vmatpush1.msra.mxu0 0.0
    %1914 = vmatprep.subr.mxu0 0.0
    %1915 = vmatpush1.msra.mxu0 0.0
    %1916 = vmatprep.subr.mxu0 0.0
    %1917 = vmatpush1.msra.mxu0 0.0
    %1918 = vmatprep.subr.mxu0 0.0
    %1919 = vmatpush1.msra.mxu0 0.0
    %1920 = vmatprep.subr.mxu0 0.0
    %1921 = vmatpush1.msra.mxu0 0.0
    %1922 = vmatprep.subr.mxu0 0.0
    %1923 = vmatpush1.msra.mxu0 0.0
    %1924 = vmatprep.subr.mxu0 0.0
    %1925 = vmatpush1.msra.mxu0 0.0
    %1926 = vmatprep.subr.mxu0 0.0
    %1927 = vmatpush1.msra.mxu0 0.0
    %1928 = vmatprep.subr.mxu0 0.0
    %1929 = vmatpush1.msra.mxu0 0.0
    %1930 = vmatprep.subr.mxu0 0.0
    %1931 = vmatpush1.msra.mxu0 0.0
    %1932 = vmatprep.subr.mxu0 0.0
    %1933 = vmatpush1.msra.mxu0 0.0
    %1934 = vmatprep.subr.mxu0 0.0
    %1935 = vmatpush1.msra.mxu0 0.0
    %1936 = vmatprep.subr.mxu0 0.0
    %1937 = vmatpush1.msra.mxu0 0.0
    %1938 = vmatprep.subr.mxu0 0.0
    %1939 = vmatpush1.msra.mxu0 0.0
    %1940 = vmatprep.subr.mxu0 0.0
    %1941 = vmatpush1.msra.mxu0 %v1906
    %1942 = vmatprep.subr.mxu0 0.0
    %1943 = vmatpush2.msra.mxu0 0.0
    %1944 = vmatprep.subr.mxu0 0.0
    %1945 = vmatpush2.msra.mxu0 0.0
    %1946 = vmatprep.subr.mxu0 0.0
    %1947 = vmatpush2.msra.mxu0 0.0
    %1948 = vmatprep.subr.mxu0 0.0
    %1949 = vmatpush2.msra.mxu0 0.0
    %1950 = vmatprep.subr.mxu0 0.0
    %1951 = vmatpush2.msra.mxu0 0.0
    %1952 = vmatprep.subr.mxu0 0.0
    %1953 = vmatpush2.msra.mxu0 0.0
    %1954 = vmatprep.subr.mxu0 0.0
    %1955 = vmatpush2.msra.mxu0 0.0
    %1956 = vmatprep.subr.mxu0 0.0
    %1957 = vmatpush2.msra.mxu0 0.0
    %1958 = vmatprep.subr.mxu0 0.0
    %1959 = vmatpush2.msra.mxu0 0.0
    %1960 = vmatprep.subr.mxu0 0.0
    %1961 = vmatpush2.msra.mxu0 0.0
    %1962 = vmatprep.subr.mxu0 0.0
    %1963 = vmatpush2.msra.mxu0 0.0
    %1964 = vmatprep.subr.mxu0 0.0
    %1965 = vmatpush2.msra.mxu0 0.0
    %1966 = vmatprep.subr.mxu0 0.0
    %1967 = vmatpush2.msra.mxu0 0.0
    %1968 = vmatprep.subr.mxu0 0.0
    %1969 = vmatpush2.msra.mxu0 0.0
    %1970 = vmatprep.subr.mxu0 0.0
    %1971 = vmatpush2.msra.mxu0 0.0
    %1972 = vmatprep.subr.mxu0 0.0
    %1973 = vmatpush2.msra.mxu0 0.0
    %1974 = vmatprep.mubr.f32.mxu0 0.0
    %1975 = vmatmul.mubr.f32.gmra.mxu0 %v1908
    %v1976 = vpop.f32.mrf.mxu0
    %v1977 = vadd.f32 0.0, %v1976
    %v1978 = vpop.f32.mrf.mxu0
    %1979 = vdwg.mxu0
    %v1980 = vld [vmem:[%s14] sm:$0xff]
    %v1981 = vld [vmem:[%s14 + $0x8] sm:$0xff]
    %v1982 = vld [vmem:[%s14 + $0x10] sm:$0xff]
    %v1983 = vld [vmem:[%s14 + $0x18] sm:$0xff]
    %v1985 = vsel %vm57, %v1977, 0
    %1987 = vmatprep.subr.mxu0 0.0
    %1988 = vmatpush1.msra.mxu0 0.0
    %1989 = vmatprep.subr.mxu0 0.0
    %1990 = vmatpush1.msra.mxu0 0.0
    %1991 = vmatprep.subr.mxu0 0.0
    %1992 = vmatpush1.msra.mxu0 0.0
    %1993 = vmatprep.subr.mxu0 0.0
    %1994 = vmatpush1.msra.mxu0 0.0
    %1995 = vmatprep.subr.mxu0 0.0
    %1996 = vmatpush1.msra.mxu0 0.0
    %1997 = vmatprep.subr.mxu0 0.0
    %1998 = vmatpush1.msra.mxu0 0.0
    %1999 = vmatprep.subr.mxu0 0.0
    %2000 = vmatpush1.msra.mxu0 0.0
    %2001 = vmatprep.subr.mxu0 0.0
    %2002 = vmatpush1.msra.mxu0 0.0
    %2003 = vmatprep.subr.mxu0 0.0
    %2004 = vmatpush1.msra.mxu0 0.0
    %2005 = vmatprep.subr.mxu0 0.0
    %2006 = vmatpush1.msra.mxu0 0.0
    %2007 = vmatprep.subr.mxu0 0.0
    %2008 = vmatpush1.msra.mxu0 0.0
    %2009 = vmatprep.subr.mxu0 0.0
    %2010 = vmatpush1.msra.mxu0 0.0
    %2011 = vmatprep.subr.mxu0 0.0
    %2012 = vmatpush1.msra.mxu0 %v1983
    %2013 = vmatprep.subr.mxu0 0.0
    %2014 = vmatpush1.msra.mxu0 %v1982
    %2015 = vmatprep.subr.mxu0 0.0
    %2016 = vmatpush1.msra.mxu0 %v1981
    %2017 = vmatprep.subr.mxu0 0.0
    %2018 = vmatpush1.msra.mxu0 %v1980
    %2019 = vmatprep.subr.mxu0 0.0
    %2020 = vmatpush2.msra.mxu0 0.0
    %2021 = vmatprep.subr.mxu0 0.0
    %2022 = vmatpush2.msra.mxu0 0.0
    %2023 = vmatprep.subr.mxu0 0.0
    %2024 = vmatpush2.msra.mxu0 0.0
    %2025 = vmatprep.subr.mxu0 0.0
    %2026 = vmatpush2.msra.mxu0 0.0
    %2027 = vmatprep.subr.mxu0 0.0
    %2028 = vmatpush2.msra.mxu0 0.0
    %2029 = vmatprep.subr.mxu0 0.0
    %2030 = vmatpush2.msra.mxu0 0.0
    %2031 = vmatprep.subr.mxu0 0.0
    %2032 = vmatpush2.msra.mxu0 0.0
    %2033 = vmatprep.subr.mxu0 0.0
    %2034 = vmatpush2.msra.mxu0 0.0
    %2035 = vmatprep.subr.mxu0 0.0
    %2036 = vmatpush2.msra.mxu0 0.0
    %2037 = vmatprep.subr.mxu0 0.0
    %2038 = vmatpush2.msra.mxu0 0.0
    %2039 = vmatprep.subr.mxu0 0.0
    %2040 = vmatpush2.msra.mxu0 0.0
    %2041 = vmatprep.subr.mxu0 0.0
    %2042 = vmatpush2.msra.mxu0 0.0
    %2043 = vmatprep.subr.mxu0 0.0
    %2044 = vmatpush2.msra.mxu0 0.0
    %2045 = vmatprep.subr.mxu0 0.0
    %2046 = vmatpush2.msra.mxu0 0.0
    %2047 = vmatprep.subr.mxu0 0.0
    %2048 = vmatpush2.msra.mxu0 0.0
    %2049 = vmatprep.subr.mxu0 0.0
    %2050 = vmatpush2.msra.mxu0 0.0
    %2051 = vmatprep.mubr.f32.mxu0 0.0
    %2052 = vmatmul.mubr.f32.gmra.mxu0 %v1985
    %v2053 = vpop.f32.mrf.mxu0
    %v2054 = vadd.f32 0.0, %v2053
    %v2055 = vpop.f32.mrf.mxu0
    %2056 = vdwg.mxu0
    %2057 = vst [vmem:[#allocation2] sm:$0x3] %v2054
    // Predicated region
    $region69: #{tpu_custom_call.1} parent=1 // pred_check
      _
    $region70: #{tpu_custom_call.1} parent=1 // pred_check_branch
      %2059 = sbr.rel (0) target = $region72
    $region71: #{tpu_custom_call.1} parent=1 // pred_region
      %s2061 = ssub.s32 32, 32
      %2062 = vsyncadd [#allocation3], %s2061
      %s2064 = sshll.u32 [#allocation2], 4
      %s2065 = int_to_ptr.vmem [resolvable:$true] %s2064
      %2067 = dma.vmem_to_hbm [thread:$0]  %s2065, 32, %s15, [#allocation3]
    $region72: #{tpu_custom_call.1} parent=1 // pred_fallthru
      _
    // Predicated region
    $region73: #{tpu_custom_call.1} parent=1 // pred_check
      _
    $region74: #{tpu_custom_call.1} parent=1 // pred_check_branch
      %2069 = sbr.rel (0) target = $region76
    $region75: #{tpu_custom_call.1} parent=1 // pred_region
      %2070 = dma.done [#allocation3], 32
    $region76: #{tpu_custom_call.1} parent=1 // pred_fallthru
      _
    %2071 = vsyncpa [#allocation3], 1

</llo_original>
